<compile_context>
chip_gen: v7x
topology: tpu7x:2x2x1
jax: 0.10.0
libtpu: 0.0.40
codegen_flags: <defaults>
</compile_context>

<pallas_src>
import functools

import jax
import jax.numpy as jnp
from jax.experimental import pallas as pl
from jax.experimental.pallas import tpu as pltpu


# ----------------------------------------------------------------------------
# Row-tile selection: big tiles (MXU-filling, low per-step overhead), but keep
# >=2 grid steps when each step can still be >=128 rows (v7x: 2 TensorCores).
# ----------------------------------------------------------------------------
def _row_tile(n_rows, max_tile=512, min_split=128):
    if n_rows % 8 != 0:
        return n_rows                       # single full-extent block (legal)
    if n_rows <= max_tile:
        half = n_rows // 2
        if n_rows % 2 == 0 and half % 8 == 0 and half >= min_split:
            return half                     # 2 parallel steps for v7x
        return n_rows                       # toy sizes: one grid step
    best = 8
    for t in range(8, max_tile + 1, 8):
        if n_rows % t == 0:
            best = t
    return best


# ----------------------------------------------------------------------------
# Kernel 1: router + capacity bookkeeping
#   switch linear -> softmax -> route_prob_max / argmax -> per-expert rank via
#   triangular-matmul exclusive cumsum + carried counts -> packed scales.
#   Output lanes: 0 = kept * route_prob_max (expert path scale)
#                 1 = 1 - kept              (residual path scale)
# ----------------------------------------------------------------------------
def router_kernel(x_ref, w_ref, b_ref, scales_ref, counts_ref, *, capacity):
    @pl.when(pl.program_id(0) == 0)
    def _():
        counts_ref[...] = jnp.zeros_like(counts_ref)

    x = x_ref[...]                                             # [tr, d] f32
    logits = jnp.dot(x, w_ref[...],
                     preferred_element_type=jnp.float32) + b_ref[...]   # [tr, E]
    m = jnp.max(logits, axis=-1, keepdims=True)
    e = jnp.exp(logits - m)
    denom = jnp.sum(e, axis=-1, keepdims=True)
    prob = e * pl.reciprocal(denom, approx=True)               # softmax (EUP recip)
    pmax = jnp.max(prob, axis=-1, keepdims=True)               # route_prob_max

    n_exp = prob.shape[-1]
    lane = jax.lax.broadcasted_iota(jnp.int32, prob.shape, 1)
    routes = jnp.min(jnp.where(prob >= pmax, lane, n_exp),
                     axis=-1, keepdims=True)                   # first argmax index
    onehot = (lane == routes).astype(jnp.float32)              # [tr, E]

    # Exclusive cumsum over tokens (within this tile) via strictly-lower-
    # triangular matmul; add counts carried from previous tiles.
    tr = x.shape[0]
    row = jax.lax.broadcasted_iota(jnp.int32, (tr, tr), 0)
    col = jax.lax.broadcasted_iota(jnp.int32, (tr, tr), 1)
    tri = (row > col).astype(jnp.float32)
    within = jnp.dot(tri, onehot, preferred_element_type=jnp.float32)   # [tr, E]

    rank = jnp.sum(onehot * (within + counts_ref[...]), axis=-1, keepdims=True)
    kept = (rank < capacity).astype(jnp.float32)               # dropped -> residual
    counts_ref[...] = counts_ref[...] + jnp.sum(onehot, axis=0, keepdims=True)

    scale_y = kept * pmax                                      # expert-output factor
    scale_x = 1.0 - kept                                       # residual factor
    lane8 = jax.lax.broadcasted_iota(jnp.int32, (tr, 8), 1)
    scales_ref[...] = jnp.where(lane8 == 0, scale_y,
                                jnp.where(lane8 == 1, scale_x, 0.0))


def run_router(x, w_sw, b_sw, *, capacity):
    S, d = x.shape
    E = w_sw.shape[1]
    tile = _row_tile(S)
    return pl.pallas_call(
        functools.partial(router_kernel, capacity=capacity),
        out_shape=jax.ShapeDtypeStruct((S, 8), jnp.float32),
        grid=(pl.cdiv(S, tile),),
        in_specs=[
            pl.BlockSpec((tile, d), lambda i: (i, 0)),
            pl.BlockSpec((d, E), lambda i: (0, 0)),
            pl.BlockSpec((1, E), lambda i: (0, 0)),
        ],
        out_specs=pl.BlockSpec((tile, 8), lambda i: (i, 0)),
        scratch_shapes=[pltpu.VMEM((1, E), jnp.float32)],      # carried expert counts
        compiler_params=pltpu.CompilerParams(
            dimension_semantics=("arbitrary",)),               # sequential carry
    )(x, w_sw, b_sw)


# ----------------------------------------------------------------------------
# Kernel 2: BertDenseExpert FFN (dense -> gelu -> dense) fused with combine.
#   Kept tokens: ffn(x) * route_prob_max; dropped tokens: residual x.
#   bf16 MXU matmuls with f32 accumulation; gelu / residual math in f32.
# ----------------------------------------------------------------------------
def ffn_combine_kernel(x_ref, s_ref, w1_ref, b1_ref, w2_ref, b2_ref, o_ref):
    x = x_ref[...]                                             # [tm, d] f32 (exact residual)
    xb = x.astype(jnp.bfloat16)
    h = jnp.dot(xb, w1_ref[...],
                preferred_element_type=jnp.float32) + b1_ref[...]
    h = jax.nn.gelu(h, approximate=True)                       # f32 elementwise
    y = jnp.dot(h.astype(jnp.bfloat16), w2_ref[...],
                preferred_element_type=jnp.float32) + b2_ref[...]
    s = s_ref[...]                                             # [tm, 8] packed scales
    scale_y = s[:, 0:1]                                        # kept * route_prob_max
    scale_x = s[:, 1:2]                                        # 1 - kept
    o_ref[...] = scale_y * y + scale_x * x


def run_ffn_combine(x, scales, w1, b1, w2, b2):
    S, d = x.shape
    inter = w1.shape[1]
    tile = _row_tile(S)

    def wspec(shape):
        # Constant-index weights/biases: single-buffer (halves weight VMEM).
        return pl.BlockSpec(shape, lambda i: (0, 0),
                            pipeline_mode=pl.Buffered(1))

    return pl.pallas_call(
        ffn_combine_kernel,
        out_shape=jax.ShapeDtypeStruct((S, d), jnp.float32),
        grid=(pl.cdiv(S, tile),),
        in_specs=[
            pl.BlockSpec((tile, d), lambda i: (i, 0)),
            pl.BlockSpec((tile, 8), lambda i: (i, 0)),
            wspec((d, inter)),
            wspec((1, inter)),
            wspec((inter, d)),
            wspec((1, d)),
        ],
        out_specs=pl.BlockSpec((tile, d), lambda i: (i, 0)),
        compiler_params=pltpu.CompilerParams(
            dimension_semantics=("parallel",)),
    )(x, scales, w1, b1, w2, b2)


# ----------------------------------------------------------------------------
# Full forward (single-rank simulation of IntraNodeMoELayer.forward)
# ----------------------------------------------------------------------------
@functools.partial(jax.jit, static_argnames=("n_experts", "capacity"))
def intra_node_moe_forward(x, params, *, n_experts, capacity):
    del n_experts  # implied by w_sw's shape
    scales = run_router(x, params["w_sw"], params["b_sw"], capacity=capacity)
    out = run_ffn_combine(x, scales, params["w1"], params["b1"],
                          params["w2"], params["b2"])
    # self.dropout(...): eval-mode dropout == identity
    return out


# ----------------------------------------------------------------------------
# Pure-JAX reference (same deterministic-keep policy) for a sanity check
# ----------------------------------------------------------------------------
def moe_reference(x, params, *, n_experts, capacity):
    logits = x @ params["w_sw"] + params["b_sw"]
    prob = jax.nn.softmax(logits, axis=-1)
    pmax = jnp.max(prob, axis=-1, keepdims=True)
    routes = jnp.argmax(prob, axis=-1)
    onehot = jax.nn.one_hot(routes, n_experts, dtype=jnp.int32)
    rank = jnp.take_along_axis(jnp.cumsum(onehot, axis=0) - onehot,
                               routes[:, None], axis=1)
    kept = (rank < capacity).astype(jnp.float32)
    h = jax.nn.gelu(x @ params["w1"].astype(jnp.float32) + params["b1"],
                    approximate=True)
    y = h @ params["w2"].astype(jnp.float32) + params["b2"]
    return kept * pmax * y + (1.0 - kept) * x


# ----------------------------------------------------------------------------
# Parameter init (deterministic, synthetic)
# ----------------------------------------------------------------------------
def init_params(key, d_model, intermediate, n_experts):
    ks = jax.random.split(key, 6)
    s = 0.02
    return {
        "w_sw": jax.random.normal(ks[0], (d_model, n_experts), jnp.float32) * s,
        "b_sw": jnp.zeros((1, n_experts), jnp.float32),
        "w1":   (jax.random.normal(ks[1], (d_model, intermediate),
                                   jnp.float32) * s).astype(jnp.bfloat16),
        "b1":   jax.random.normal(ks[2], (1, intermediate), jnp.float32) * s,
        "w2":   (jax.random.normal(ks[3], (intermediate, d_model),
                                   jnp.float32) * s).astype(jnp.bfloat16),
        "b2":   jax.random.normal(ks[4], (1, d_model), jnp.float32) * s,
    }


if __name__ == "__main__":
    # Small, kernel-friendly shapes consistent with the module's forward:
    # x: [intra_node_seq_len, d_model]
    seq_len = 64
    d_model = 128
    intermediate = 256
    n_experts = 4
    capacity_factor = 2.0
    capacity = int(capacity_factor * seq_len / n_experts)   # 32

    key = jax.random.PRNGKey(0)
    kx, kp = jax.random.split(key)
    x = jax.random.normal(kx, (seq_len, d_model), jnp.float32)
    params = init_params(kp, d_model, intermediate, n_experts)

    out = intra_node_moe_forward(x, params, n_experts=n_experts,
                                 capacity=capacity)
    out = jax.block_until_ready(out)
    assert out.shape == (seq_len, d_model) and out.dtype == jnp.float32
    assert bool(jnp.all(jnp.isfinite(out)))

    ref = moe_reference(x, params, n_experts=n_experts, capacity=capacity)
    assert bool(jnp.allclose(out, ref, rtol=5e-2, atol=5e-2))

    print("KERNEL_OK")
</pallas_src>

<mosaic_0001>
module attributes {stable_mosaic.version = 11 : i64} {
  func.func @ffn_combine_kernel(%arg0: i32, %arg1: memref<64x128xf32, #tpu.memory_space<vmem>>, %arg2: memref<64x8xf32, #tpu.memory_space<vmem>>, %arg3: memref<128x256xbf16, #tpu.memory_space<vmem>>, %arg4: memref<1x256xf32, #tpu.memory_space<vmem>>, %arg5: memref<256x128xbf16, #tpu.memory_space<vmem>>, %arg6: memref<1x128xf32, #tpu.memory_space<vmem>>, %arg7: memref<64x128xf32, #tpu.memory_space<vmem>>) attributes {dimension_semantics = [#tpu.dimension_semantics<parallel>], iteration_bounds = array<i64: 1>, scalar_prefetch = 0 : i64, scratch_operands = 0 : i64, tpu.core_type = #tpu.core_type<tc>, window_params = [{transform_indices = @transform_0, window_bounds = array<i64: 64, 128>}, {transform_indices = @transform_1, window_bounds = array<i64: 64, 8>}, {pipeline_mode = #tpu.pipeline_mode<synchronous>, transform_indices = @transform_2, window_bounds = array<i64: 128, 256>}, {pipeline_mode = #tpu.pipeline_mode<synchronous>, transform_indices = @transform_3, window_bounds = array<i64: 1, 256>}, {pipeline_mode = #tpu.pipeline_mode<synchronous>, transform_indices = @transform_4, window_bounds = array<i64: 256, 128>}, {pipeline_mode = #tpu.pipeline_mode<synchronous>, transform_indices = @transform_5, window_bounds = array<i64: 1, 128>}, {transform_indices = @transform_6, window_bounds = array<i64: 64, 128>}]} {
    %c0 = arith.constant 0 : index
    %c0_0 = arith.constant 0 : index
    %0 = vector.load %arg1[%c0, %c0_0] : memref<64x128xf32, #tpu.memory_space<vmem>>, vector<64x128xf32>
    %1 = arith.truncf %0 : vector<64x128xf32> to vector<64x128xbf16>
    %c0_1 = arith.constant 0 : index
    %c0_2 = arith.constant 0 : index
    %2 = vector.load %arg3[%c0_1, %c0_2] : memref<128x256xbf16, #tpu.memory_space<vmem>>, vector<128x256xbf16>
    %cst = arith.constant dense<0.000000e+00> : vector<64x256xf32>
    %3 = tpu.matmul %1, %2, %cst {dimension_numbers = #tpu.dot_dimension_numbers<[1], [0], [0], [1], [0, 0, 1, 1], [], []>} : vector<64x128xbf16>, vector<128x256xbf16>, vector<64x256xf32> -> vector<64x256xf32>
    %c0_3 = arith.constant 0 : index
    %c0_4 = arith.constant 0 : index
    %4 = vector.load %arg4[%c0_3, %c0_4] : memref<1x256xf32, #tpu.memory_space<vmem>>, vector<1x256xf32>
    %5 = vector.broadcast %4 : vector<1x256xf32> to vector<64x256xf32>
    %6 = arith.addf %3, %5 : vector<64x256xf32>
    %7 = arith.mulf %6, %6 : vector<64x256xf32>
    %8 = arith.mulf %6, %7 : vector<64x256xf32>
    %cst_5 = arith.constant 4.471500e-02 : f32
    %9 = vector.broadcast %cst_5 : f32 to vector<64x256xf32>
    %10 = arith.mulf %9, %8 : vector<64x256xf32>
    %11 = arith.addf %6, %10 : vector<64x256xf32>
    %cst_6 = arith.constant 0.797884583 : f32
    %12 = vector.broadcast %cst_6 : f32 to vector<64x256xf32>
    %13 = arith.mulf %12, %11 : vector<64x256xf32>
    %14 = math.tanh %13 : vector<64x256xf32>
    %cst_7 = arith.constant 1.000000e+00 : f32
    %15 = vector.broadcast %cst_7 : f32 to vector<64x256xf32>
    %16 = arith.addf %15, %14 : vector<64x256xf32>
    %cst_8 = arith.constant 5.000000e-01 : f32
    %17 = vector.broadcast %cst_8 : f32 to vector<64x256xf32>
    %18 = arith.mulf %17, %16 : vector<64x256xf32>
    %19 = arith.mulf %6, %18 : vector<64x256xf32>
    %20 = arith.truncf %19 : vector<64x256xf32> to vector<64x256xbf16>
    %c0_9 = arith.constant 0 : index
    %c0_10 = arith.constant 0 : index
    %21 = vector.load %arg5[%c0_9, %c0_10] : memref<256x128xbf16, #tpu.memory_space<vmem>>, vector<256x128xbf16>
    %cst_11 = arith.constant dense<0.000000e+00> : vector<64x128xf32>
    %22 = tpu.matmul %20, %21, %cst_11 {dimension_numbers = #tpu.dot_dimension_numbers<[1], [0], [0], [1], [0, 0, 1, 1], [], []>} : vector<64x256xbf16>, vector<256x128xbf16>, vector<64x128xf32> -> vector<64x128xf32>
    %c0_12 = arith.constant 0 : index
    %c0_13 = arith.constant 0 : index
    %23 = vector.load %arg6[%c0_12, %c0_13] : memref<1x128xf32, #tpu.memory_space<vmem>>, vector<1x128xf32>
    %24 = vector.broadcast %23 : vector<1x128xf32> to vector<64x128xf32>
    %25 = arith.addf %22, %24 : vector<64x128xf32>
    %c0_14 = arith.constant 0 : index
    %c0_15 = arith.constant 0 : index
    %26 = vector.load %arg2[%c0_14, %c0_15] : memref<64x8xf32, #tpu.memory_space<vmem>>, vector<64x8xf32>
    %27 = vector.extract_strided_slice %26 {offsets = [0, 0], sizes = [64, 1], strides = [1, 1]} : vector<64x8xf32> to vector<64x1xf32>
    %28 = vector.extract_strided_slice %26 {offsets = [0, 1], sizes = [64, 1], strides = [1, 1]} : vector<64x8xf32> to vector<64x1xf32>
    %29 = vector.broadcast %27 : vector<64x1xf32> to vector<64x128xf32>
    %30 = arith.mulf %29, %25 : vector<64x128xf32>
    %31 = vector.broadcast %28 : vector<64x1xf32> to vector<64x128xf32>
    %32 = arith.mulf %31, %0 : vector<64x128xf32>
    %33 = arith.addf %30, %32 : vector<64x128xf32>
    %c0_16 = arith.constant 0 : index
    %c0_17 = arith.constant 0 : index
    %34 = vector.load %arg7[%c0_16, %c0_17] : memref<64x128xf32, #tpu.memory_space<vmem>>, vector<64x128xf32>
    tpu.vector_store %arg7[%c0_16, %c0_17], %33 {strides = array<i32>} : memref<64x128xf32, #tpu.memory_space<vmem>>, vector<64x128xf32>,
    return
  }
  func.func @transform_0(%arg0: i32) -> (i32, i32) {
    %c0_i32 = arith.constant 0 : i32
    %c0_i32_0 = arith.constant 0 : i32
    return %arg0, %c0_i32 : i32, i32
  }
  func.func @transform_1(%arg0: i32) -> (i32, i32) {
    %c0_i32 = arith.constant 0 : i32
    %c0_i32_0 = arith.constant 0 : i32
    return %arg0, %c0_i32 : i32, i32
  }
  func.func @transform_2(%arg0: i32) -> (i32, i32) {
    %c0_i32 = arith.constant 0 : i32
    %c0_i32_0 = arith.constant 0 : i32
    %c0_i32_1 = arith.constant 0 : i32
    return %c0_i32, %c0_i32_0 : i32, i32
  }
  func.func @transform_3(%arg0: i32) -> (i32, i32) {
    %c0_i32 = arith.constant 0 : i32
    %c0_i32_0 = arith.constant 0 : i32
    %c0_i32_1 = arith.constant 0 : i32
    return %c0_i32, %c0_i32_0 : i32, i32
  }
  func.func @transform_4(%arg0: i32) -> (i32, i32) {
    %c0_i32 = arith.constant 0 : i32
    %c0_i32_0 = arith.constant 0 : i32
    %c0_i32_1 = arith.constant 0 : i32
    return %c0_i32, %c0_i32_0 : i32, i32
  }
  func.func @transform_5(%arg0: i32) -> (i32, i32) {
    %c0_i32 = arith.constant 0 : i32
    %c0_i32_0 = arith.constant 0 : i32
    %c0_i32_1 = arith.constant 0 : i32
    return %c0_i32, %c0_i32_0 : i32, i32
  }
  func.func @transform_6(%arg0: i32) -> (i32, i32) {
    %c0_i32 = arith.constant 0 : i32
    %c0_i32_0 = arith.constant 0 : i32
    return %arg0, %c0_i32 : i32, i32
  }
}

module attributes {stable_mosaic.version = 11 : i64} {
  func.func @router_kernel(%arg0: i32, %arg1: memref<64x128xf32, #tpu.memory_space<vmem>>, %arg2: memref<128x4xf32, #tpu.memory_space<vmem>>, %arg3: memref<1x4xf32, #tpu.memory_space<vmem>>, %arg4: memref<64x8xf32, #tpu.memory_space<vmem>>, %arg5: memref<1x4xf32, #tpu.memory_space<vmem>>) attributes {dimension_semantics = [#tpu.dimension_semantics<arbitrary>], iteration_bounds = array<i64: 1>, scalar_prefetch = 0 : i64, scratch_operands = 1 : i64, tpu.core_type = #tpu.core_type<tc>, window_params = [{transform_indices = @transform_0, window_bounds = array<i64: 64, 128>}, {pipeline_mode = #tpu.pipeline_mode<synchronous>, transform_indices = @transform_1, window_bounds = array<i64: 128, 4>}, {pipeline_mode = #tpu.pipeline_mode<synchronous>, transform_indices = @transform_2, window_bounds = array<i64: 1, 4>}, {transform_indices = @transform_3, window_bounds = array<i64: 64, 8>}]} {
    %c0_i32 = arith.constant 0 : i32
    %0 = arith.cmpi eq, %arg0, %c0_i32 : i32
    %1 = arith.extui %0 : i1 to i32
    %c0_i32_0 = arith.constant 0 : i32
    %2 = arith.cmpi ne, %1, %c0_i32_0 : i32
    scf.if %2 {
      %cst_25 = arith.constant 0.000000e+00 : f32
      %69 = vector.broadcast %cst_25 : f32 to vector<1x4xf32>
      %c0_26 = arith.constant 0 : index
      %c0_27 = arith.constant 0 : index
      %70 = vector.load %arg5[%c0_26, %c0_27] : memref<1x4xf32, #tpu.memory_space<vmem>>, vector<1x4xf32>
      tpu.vector_store %arg5[%c0_26, %c0_27], %69 {strides = array<i32>} : memref<1x4xf32, #tpu.memory_space<vmem>>, vector<1x4xf32>,
    } else {
    }
    %c0 = arith.constant 0 : index
    %c0_1 = arith.constant 0 : index
    %3 = vector.load %arg1[%c0, %c0_1] : memref<64x128xf32, #tpu.memory_space<vmem>>, vector<64x128xf32>
    %c0_2 = arith.constant 0 : index
    %c0_3 = arith.constant 0 : index
    %4 = vector.load %arg2[%c0_2, %c0_3] : memref<128x4xf32, #tpu.memory_space<vmem>>, vector<128x4xf32>
    %cst = arith.constant dense<0.000000e+00> : vector<64x4xf32>
    %5 = tpu.matmul %3, %4, %cst {dimension_numbers = #tpu.dot_dimension_numbers<[1], [0], [0], [1], [0, 0, 1, 1], [], []>} : vector<64x128xf32>, vector<128x4xf32>, vector<64x4xf32> -> vector<64x4xf32>
    %c0_4 = arith.constant 0 : index
    %c0_5 = arith.constant 0 : index
    %6 = vector.load %arg3[%c0_4, %c0_5] : memref<1x4xf32, #tpu.memory_space<vmem>>, vector<1x4xf32>
    %7 = vector.broadcast %6 : vector<1x4xf32> to vector<64x4xf32>
    %8 = arith.addf %5, %7 : vector<64x4xf32>
    %cst_6 = arith.constant dense<0xFF800000> : vector<64xf32>
    %9 = vector.multi_reduction <maximumf>, %8, %cst_6 [1] : vector<64x4xf32> to vector<64xf32>
    %10 = vector.shape_cast %9 : vector<64xf32> to vector<64x1xf32>
    %11 = vector.broadcast %10 : vector<64x1xf32> to vector<64x4xf32>
    %12 = arith.subf %8, %11 : vector<64x4xf32>
    %13 = math.exp %12 : vector<64x4xf32>
    %cst_7 = arith.constant dense<0.000000e+00> : vector<64xf32>
    %14 = vector.multi_reduction <add>, %13, %cst_7 [1] : vector<64x4xf32> to vector<64xf32>
    %15 = vector.shape_cast %14 : vector<64xf32> to vector<64x1xf32>
    %16 = tpu.reciprocal %15 {approx = true} : vector<64x1xf32> -> vector<64x1xf32>
    %17 = vector.broadcast %16 : vector<64x1xf32> to vector<64x4xf32>
    %18 = arith.mulf %13, %17 : vector<64x4xf32>
    %cst_8 = arith.constant dense<0xFF800000> : vector<64xf32>
    %19 = vector.multi_reduction <maximumf>, %18, %cst_8 [1] : vector<64x4xf32> to vector<64xf32>
    %20 = vector.shape_cast %19 : vector<64xf32> to vector<64x1xf32>
    %21 = tpu.iota {dimensions = array<i32: 1>} : vector<64x4xi32>
    %22 = vector.broadcast %20 : vector<64x1xf32> to vector<64x4xf32>
    %23 = arith.cmpf oge, %18, %22 : vector<64x4xf32>
    %c4_i32 = arith.constant 4 : i32
    %24 = vector.broadcast %c4_i32 : i32 to vector<64x4xi32>
    %25 = arith.select %23, %21, %24 : vector<64x4xi1>, vector<64x4xi32>
    %cst_9 = arith.constant dense<2147483647> : vector<64xi32>
    %26 = vector.multi_reduction <minsi>, %25, %cst_9 [1] : vector<64x4xi32> to vector<64xi32>
    %27 = vector.shape_cast %26 : vector<64xi32> to vector<64x1xi32>
    %28 = vector.broadcast %27 : vector<64x1xi32> to vector<64x4xi32>
    %29 = arith.cmpi eq, %21, %28 : vector<64x4xi32>
    %30 = arith.extui %29 : vector<64x4xi1> to vector<64x4xi32>
    %31 = arith.sitofp %30 : vector<64x4xi32> to vector<64x4xf32>
    %32 = tpu.iota {dimensions = array<i32: 0>} : vector<64x64xi32>
    %33 = tpu.iota {dimensions = array<i32: 1>} : vector<64x64xi32>
    %34 = arith.cmpi sgt, %32, %33 : vector<64x64xi32>
    %35 = arith.extui %34 : vector<64x64xi1> to vector<64x64xi32>
    %36 = arith.sitofp %35 : vector<64x64xi32> to vector<64x64xf32>
    %cst_10 = arith.constant dense<0.000000e+00> : vector<64x4xf32>
    %37 = tpu.matmul %36, %31, %cst_10 {dimension_numbers = #tpu.dot_dimension_numbers<[1], [0], [0], [1], [0, 0, 1, 1], [], []>} : vector<64x64xf32>, vector<64x4xf32>, vector<64x4xf32> -> vector<64x4xf32>
    %c0_11 = arith.constant 0 : index
    %c0_12 = arith.constant 0 : index
    %38 = vector.load %arg5[%c0_11, %c0_12] : memref<1x4xf32, #tpu.memory_space<vmem>>, vector<1x4xf32>
    %39 = vector.broadcast %38 : vector<1x4xf32> to vector<64x4xf32>
    %40 = arith.addf %37, %39 : vector<64x4xf32>
    %41 = arith.mulf %31, %40 : vector<64x4xf32>
    %cst_13 = arith.constant dense<0.000000e+00> : vector<64xf32>
    %42 = vector.multi_reduction <add>, %41, %cst_13 [1] : vector<64x4xf32> to vector<64xf32>
    %43 = vector.shape_cast %42 : vector<64xf32> to vector<64x1xf32>
    %cst_14 = arith.constant 3.200000e+01 : f32
    %44 = vector.broadcast %cst_14 : f32 to vector<64x1xf32>
    %45 = arith.cmpf olt, %43, %44 : vector<64x1xf32>
    %46 = arith.extui %45 : vector<64x1xi1> to vector<64x1xi32>
    %47 = arith.sitofp %46 : vector<64x1xi32> to vector<64x1xf32>
    %c0_15 = arith.constant 0 : index
    %c0_16 = arith.constant 0 : index
    %48 = vector.load %arg5[%c0_15, %c0_16] : memref<1x4xf32, #tpu.memory_space<vmem>>, vector<1x4xf32>
    %cst_17 = arith.constant dense<0.000000e+00> : vector<4xf32>
    %49 = vector.multi_reduction <add>, %31, %cst_17 [0] : vector<64x4xf32> to vector<4xf32>
    %50 = vector.shape_cast %49 : vector<4xf32> to vector<1x4xf32>
    %51 = arith.addf %48, %50 : vector<1x4xf32>
    %c0_18 = arith.constant 0 : index
    %c0_19 = arith.constant 0 : index
    %52 = vector.load %arg5[%c0_18, %c0_19] : memref<1x4xf32, #tpu.memory_space<vmem>>, vector<1x4xf32>
    tpu.vector_store %arg5[%c0_18, %c0_19], %51 {strides = array<i32>} : memref<1x4xf32, #tpu.memory_space<vmem>>, vector<1x4xf32>,
    %53 = arith.mulf %47, %20 : vector<64x1xf32>
    %cst_20 = arith.constant 1.000000e+00 : f32
    %54 = vector.broadcast %cst_20 : f32 to vector<64x1xf32>
    %55 = arith.subf %54, %47 : vector<64x1xf32>
    %56 = tpu.iota {dimensions = array<i32: 1>} : vector<64x8xi32>
    %c0_i32_21 = arith.constant 0 : i32
    %57 = vector.broadcast %c0_i32_21 : i32 to vector<64x8xi32>
    %58 = arith.cmpi eq, %56, %57 : vector<64x8xi32>
    %c1_i32 = arith.constant 1 : i32
    %59 = vector.broadcast %c1_i32 : i32 to vector<64x8xi32>
    %60 = arith.cmpi eq, %56, %59 : vector<64x8xi32>
    %cst_22 = arith.constant 0.000000e+00 : f32
    %61 = vector.shape_cast %55 : vector<64x1xf32> to vector<64x1xf32>
    %62 = vector.broadcast %61 : vector<64x1xf32> to vector<64x8xf32>
    %63 = vector.broadcast %cst_22 : f32 to vector<64x8xf32>
    %64 = arith.select %60, %62, %63 : vector<64x8xi1>, vector<64x8xf32>
    %65 = vector.shape_cast %53 : vector<64x1xf32> to vector<64x1xf32>
    %66 = vector.broadcast %65 : vector<64x1xf32> to vector<64x8xf32>
    %67 = arith.select %58, %66, %64 : vector<64x8xi1>, vector<64x8xf32>
    %c0_23 = arith.constant 0 : index
    %c0_24 = arith.constant 0 : index
    %68 = vector.load %arg4[%c0_23, %c0_24] : memref<64x8xf32, #tpu.memory_space<vmem>>, vector<64x8xf32>
    tpu.vector_store %arg4[%c0_23, %c0_24], %67 {strides = array<i32>} : memref<64x8xf32, #tpu.memory_space<vmem>>, vector<64x8xf32>,
    return
  }
  func.func @transform_0(%arg0: i32) -> (i32, i32) {
    %c0_i32 = arith.constant 0 : i32
    %c0_i32_0 = arith.constant 0 : i32
    return %arg0, %c0_i32 : i32, i32
  }
  func.func @transform_1(%arg0: i32) -> (i32, i32) {
    %c0_i32 = arith.constant 0 : i32
    %c0_i32_0 = arith.constant 0 : i32
    %c0_i32_1 = arith.constant 0 : i32
    return %c0_i32, %c0_i32_0 : i32, i32
  }
  func.func @transform_2(%arg0: i32) -> (i32, i32) {
    %c0_i32 = arith.constant 0 : i32
    %c0_i32_0 = arith.constant 0 : i32
    %c0_i32_1 = arith.constant 0 : i32
    return %c0_i32, %c0_i32_0 : i32, i32
  }
  func.func @transform_3(%arg0: i32) -> (i32, i32) {
    %c0_i32 = arith.constant 0 : i32
    %c0_i32_0 = arith.constant 0 : i32
    return %arg0, %c0_i32 : i32, i32
  }
}

</mosaic_0001>

<llo_original>
// kernel: intra_node_moe_forward.2
$region0: #{intra_node_moe_forward.2}
  #allocation0 [shape = 'u32[]', space=smem, size = 0x4, offset = 0x4, fixed_abs, tag = 'smem constant byte address 0x4 - core index']
  #allocation1 [shape = 'u32[144,128]{1,0:T(1,128)}', space=vmem, size = 0x12000, scoped, tag = 'internal scratch']
  #allocation2 [shape = 'f32[1,4]{1,0:T(1,128)}', space=vmem, size = 0x200, scoped, tag = 'scratch operand']
  %s0 = inlined_call_operand.vmem [shape: f32[64,128], index: 0, kind: input, shape index: {}]
  %s1 = inlined_call_operand.vmem [shape: f32[128,4], index: 1, kind: input, shape index: {}]
  %s2 = inlined_call_operand.vmem [shape: f32[1,4], index: 2, kind: input, shape index: {}]
  %s3 = inlined_call_operand.vmem [shape: f32[64,8], index: 3, kind: output, shape index: {}]
  %s4 = sld [smem:[#allocation0]]
  $region26: #{intra_node_moe_forward.2} parent=0
    _
  %s6 = ssub.s32 1, %s4
  %s7 = scalar_select 0, %s6, %s4
  // Predicated region
  $region2: #{intra_node_moe_forward.2} parent=0 // pred_check
    _
  $region3: #{intra_node_moe_forward.2} parent=0 // pred_check_branch
    %9 = sbr.rel (0) target = $region5
  $region4: #{intra_node_moe_forward.2} parent=0 // pred_region
    _
  $region5: #{intra_node_moe_forward.2} parent=0 // pred_fallthru
    _
  // Predicated region
  $region6: #{intra_node_moe_forward.2} parent=0 // pred_check
    _
  $region7: #{intra_node_moe_forward.2} parent=0 // pred_check_branch
    %11 = sbr.rel (0) target = $region9
  $region8: #{intra_node_moe_forward.2} parent=0 // pred_region
    _
  $region9: #{intra_node_moe_forward.2} parent=0 // pred_fallthru
    _
  // Predicated region
  $region10: #{intra_node_moe_forward.2} parent=0 // pred_check
    _
  $region11: #{intra_node_moe_forward.2} parent=0 // pred_check_branch
    %13 = sbr.rel (0) target = $region13
  $region12: #{intra_node_moe_forward.2} parent=0 // pred_region
    _
  $region13: #{intra_node_moe_forward.2} parent=0 // pred_fallthru
    _
  %p14 = scmp.eq.s32.totalorder 0, 0
  // Predicated region
  $region14: #{intra_node_moe_forward.2} parent=0 // pred_check
    %p15 = pneg %p14
  $region15: #{intra_node_moe_forward.2} parent=0 // pred_check_branch
    %17 = sbr.rel (%p15) target = $region17
  $region16: #{intra_node_moe_forward.2} parent=0 // pred_region
    %vm18 = vcmask 24576
    %19 = vst.msk [vmem:[#allocation2] sm:$0x1] %vm18, 0.0
  $region17: #{intra_node_moe_forward.2} parent=0 // pred_fallthru
    _
  %v20 = vld [vmem:[%s0] sm:$0xff]
  %v21 = vld [vmem:[%s0 + $0x8] sm:$0xff]
  %v22 = vld [vmem:[%s0 + $0x10] sm:$0xff]
  %v23 = vld [vmem:[%s0 + $0x18] sm:$0xff]
  %v24 = vld [vmem:[%s0 + $0x20] sm:$0xff]
  %v25 = vld [vmem:[%s0 + $0x28] sm:$0xff]
  %v26 = vld [vmem:[%s0 + $0x30] sm:$0xff]
  %v27 = vld [vmem:[%s0 + $0x38] sm:$0xff]
  %v28 = vld [vmem:[%s1] sm:$0xff]
  %v29 = vld [vmem:[%s1 + $0x8] sm:$0xff]
  %v30 = vld [vmem:[%s1 + $0x10] sm:$0xff]
  %v31 = vld [vmem:[%s1 + $0x18] sm:$0xff]
  %v32 = vld [vmem:[%s1 + $0x20] sm:$0xff]
  %v33 = vld [vmem:[%s1 + $0x28] sm:$0xff]
  %v34 = vld [vmem:[%s1 + $0x30] sm:$0xff]
  %v35 = vld [vmem:[%s1 + $0x38] sm:$0xff]
  %v36 = vld [vmem:[%s1 + $0x40] sm:$0xff]
  %v37 = vld [vmem:[%s1 + $0x48] sm:$0xff]
  %v38 = vld [vmem:[%s1 + $0x50] sm:$0xff]
  %v39 = vld [vmem:[%s1 + $0x58] sm:$0xff]
  %v40 = vld [vmem:[%s1 + $0x60] sm:$0xff]
  %v41 = vld [vmem:[%s1 + $0x68] sm:$0xff]
  %v42 = vld [vmem:[%s1 + $0x70] sm:$0xff]
  %v43 = vld [vmem:[%s1 + $0x78] sm:$0xff]
  %v44 = vld [vmem:[%s2] sm:$0x1]
  %v46 = vlaneseq
  %v47 = vshrl.u32 %v46, 7
  %v48 = vsub.s32 0, %v47
  %v49 = vrot.slane %v44, %v48
  %51 = vmatprep.subr.mxu0 0.0
  %52 = vmatpush1.msra.mxu0 %v28
  %53 = vmatprep.subr.mxu0 0.0
  %54 = vmatpush1.msra.mxu0 %v29
  %55 = vmatprep.subr.mxu0 0.0
  %56 = vmatpush1.msra.mxu0 %v30
  %57 = vmatprep.subr.mxu0 0.0
  %58 = vmatpush1.msra.mxu0 %v31
  %59 = vmatprep.subr.mxu0 0.0
  %60 = vmatpush1.msra.mxu0 %v32
  %61 = vmatprep.subr.mxu0 0.0
  %62 = vmatpush1.msra.mxu0 %v33
  %63 = vmatprep.subr.mxu0 0.0
  %64 = vmatpush1.msra.mxu0 %v34
  %65 = vmatprep.subr.mxu0 0.0
  %66 = vmatpush1.msra.mxu0 %v35
  %67 = vmatprep.subr.mxu0 0.0
  %68 = vmatpush1.msra.mxu0 %v36
  %69 = vmatprep.subr.mxu0 0.0
  %70 = vmatpush1.msra.mxu0 %v37
  %71 = vmatprep.subr.mxu0 0.0
  %72 = vmatpush1.msra.mxu0 %v38
  %73 = vmatprep.subr.mxu0 0.0
  %74 = vmatpush1.msra.mxu0 %v39
  %75 = vmatprep.subr.mxu0 0.0
  %76 = vmatpush1.msra.mxu0 %v40
  %77 = vmatprep.subr.mxu0 0.0
  %78 = vmatpush1.msra.mxu0 %v41
  %79 = vmatprep.subr.mxu0 0.0
  %80 = vmatpush1.msra.mxu0 %v42
  %81 = vmatprep.subr.mxu0 0.0
  %82 = vmatpush1.msra.mxu0 %v43
  %83 = vmatprep.subr.mxu0 0.0
  %84 = vmatpush1.msra.mxu0 0.0
  %85 = vmatprep.subr.mxu0 0.0
  %86 = vmatpush1.msra.mxu0 0.0
  %87 = vmatprep.subr.mxu0 0.0
  %88 = vmatpush1.msra.mxu0 0.0
  %89 = vmatprep.subr.mxu0 0.0
  %90 = vmatpush1.msra.mxu0 0.0
  %91 = vmatprep.subr.mxu0 0.0
  %92 = vmatpush1.msra.mxu0 0.0
  %93 = vmatprep.subr.mxu0 0.0
  %94 = vmatpush1.msra.mxu0 0.0
  %95 = vmatprep.subr.mxu0 0.0
  %96 = vmatpush1.msra.mxu0 0.0
  %97 = vmatprep.subr.mxu0 0.0
  %98 = vmatpush1.msra.mxu0 0.0
  %99 = vmatprep.subr.mxu0 0.0
  %100 = vmatpush1.msra.mxu0 0.0
  %101 = vmatprep.subr.mxu0 0.0
  %102 = vmatpush1.msra.mxu0 0.0
  %103 = vmatprep.subr.mxu0 0.0
  %104 = vmatpush1.msra.mxu0 0.0
  %105 = vmatprep.subr.mxu0 0.0
  %106 = vmatpush1.msra.mxu0 0.0
  %107 = vmatprep.subr.mxu0 0.0
  %108 = vmatpush1.msra.mxu0 0.0
  %109 = vmatprep.subr.mxu0 0.0
  %110 = vmatpush1.msra.mxu0 0.0
  %111 = vmatprep.subr.mxu0 0.0
  %112 = vmatpush1.msra.mxu0 0.0
  %113 = vmatprep.subr.mxu0 0.0
  %114 = vmatpush1.msra.mxu0 0.0
  %115 = vmatprep.mubr.f32.mxu0 0.0
  %116 = vmatmul.mubr.f32.gmra.mrb[0].mxu0 %v20
  %v117 = vpop.f32.mrb[0].mxu0
  %v118 = vadd.f32 %v49, %v117
  %v119 = vpop.f32.mrb[0].mxu0
  %120 = vmatprep.mubr.f32.mxu0 0.0
  %121 = vmatmul.mubr.f32.gmra.mrb[0].mxu0 %v21
  %v122 = vpop.f32.mrb[0].mxu0
  %v123 = vadd.f32 %v49, %v122
  %v124 = vpop.f32.mrb[0].mxu0
  %125 = vmatprep.mubr.f32.mxu0 0.0
  %126 = vmatmul.mubr.f32.gmra.mrb[0].mxu0 %v22
  %v127 = vpop.f32.mrb[0].mxu0
  %v128 = vadd.f32 %v49, %v127
  %v129 = vpop.f32.mrb[0].mxu0
  %130 = vmatprep.mubr.f32.mxu0 0.0
  %131 = vmatmul.mubr.f32.gmra.mrb[0].mxu0 %v23
  %v132 = vpop.f32.mrb[0].mxu0
  %v133 = vadd.f32 %v49, %v132
  %v134 = vpop.f32.mrb[0].mxu0
  %135 = vmatprep.mubr.f32.mxu0 0.0
  %136 = vmatmul.mubr.f32.gmra.mrb[0].mxu0 %v24
  %v137 = vpop.f32.mrb[0].mxu0
  %v138 = vadd.f32 %v49, %v137
  %v139 = vpop.f32.mrb[0].mxu0
  %140 = vmatprep.mubr.f32.mxu0 0.0
  %141 = vmatmul.mubr.f32.gmra.mrb[0].mxu0 %v25
  %v142 = vpop.f32.mrb[0].mxu0
  %v143 = vadd.f32 %v49, %v142
  %v144 = vpop.f32.mrb[0].mxu0
  %145 = vmatprep.mubr.f32.mxu0 0.0
  %146 = vmatmul.mubr.f32.gmra.mrb[0].mxu0 %v26
  %v147 = vpop.f32.mrb[0].mxu0
  %v148 = vadd.f32 %v49, %v147
  %v149 = vpop.f32.mrb[0].mxu0
  %150 = vmatprep.mubr.f32.mxu0 0.0
  %151 = vmatmul.mubr.f32.gmra.mrb[0].mxu0 %v27
  %v152 = vpop.f32.mrb[0].mxu0
  %v153 = vadd.f32 %v49, %v152
  %v154 = vpop.f32.mrb[0].mxu0
  %155 = vdwg.mxu0
  %vm156 = vcmask 31744
  %v157 = vsel %vm156, %v118, -inf
  %158 = vmax.xlane.f32.xlu0 %v157
  %v159 = vpop.xlane.xlu0 %158
  %v160 = vsel %vm156, %v123, -inf
  %161 = vmax.xlane.f32.xlu0 %v160
  %v162 = vpop.xlane.xlu0 %161
  %v163 = vsel %vm156, %v128, -inf
  %164 = vmax.xlane.f32.xlu0 %v163
  %v165 = vpop.xlane.xlu0 %164
  %v166 = vsel %vm156, %v133, -inf
  %167 = vmax.xlane.f32.xlu0 %v166
  %v168 = vpop.xlane.xlu0 %167
  %v169 = vsel %vm156, %v138, -inf
  %170 = vmax.xlane.f32.xlu0 %v169
  %v171 = vpop.xlane.xlu0 %170
  %v172 = vsel %vm156, %v143, -inf
  %173 = vmax.xlane.f32.xlu0 %v172
  %v174 = vpop.xlane.xlu0 %173
  %v175 = vsel %vm156, %v148, -inf
  %176 = vmax.xlane.f32.xlu0 %v175
  %v177 = vpop.xlane.xlu0 %176
  %v178 = vsel %vm156, %v153, -inf
  %179 = vmax.xlane.f32.xlu0 %v178
  %v180 = vpop.xlane.xlu0 %179
  %v181 = vsub.f32 %v118, %v159
  %v182 = vsub.f32 %v123, %v162
  %v183 = vsub.f32 %v128, %v165
  %v184 = vsub.f32 %v133, %v168
  %v185 = vsub.f32 %v138, %v171
  %v186 = vsub.f32 %v143, %v174
  %v187 = vsub.f32 %v148, %v177
  %v188 = vsub.f32 %v153, %v180
  %v189 = vmul.f32 %v181, 1.442695
  %v190 = vpow.pop %v189
  %v191 = vmul.f32 %v182, 1.442695
  %v192 = vpow.pop %v191
  %v193 = vmul.f32 %v183, 1.442695
  %v194 = vpow.pop %v193
  %v195 = vmul.f32 %v184, 1.442695
  %v196 = vpow.pop %v195
  %v197 = vmul.f32 %v185, 1.442695
  %v198 = vpow.pop %v197
  %v199 = vmul.f32 %v186, 1.442695
  %v200 = vpow.pop %v199
  %v201 = vmul.f32 %v187, 1.442695
  %v202 = vpow.pop %v201
  %v203 = vmul.f32 %v188, 1.442695
  %v204 = vpow.pop %v203
  %v205 = vsel %vm156, %v190, 0.0
  %206 = vadd.xlane.f32.xlu0 %v205
  %v207 = vpop.xlane.xlu0 %206
  %v208 = vsel %vm156, %v192, 0.0
  %209 = vadd.xlane.f32.xlu0 %v208
  %v210 = vpop.xlane.xlu0 %209
  %v211 = vsel %vm156, %v194, 0.0
  %212 = vadd.xlane.f32.xlu0 %v211
  %v213 = vpop.xlane.xlu0 %212
  %v214 = vsel %vm156, %v196, 0.0
  %215 = vadd.xlane.f32.xlu0 %v214
  %v216 = vpop.xlane.xlu0 %215
  %v217 = vsel %vm156, %v198, 0.0
  %218 = vadd.xlane.f32.xlu0 %v217
  %v219 = vpop.xlane.xlu0 %218
  %v220 = vsel %vm156, %v200, 0.0
  %221 = vadd.xlane.f32.xlu0 %v220
  %v222 = vpop.xlane.xlu0 %221
  %v223 = vsel %vm156, %v202, 0.0
  %224 = vadd.xlane.f32.xlu0 %v223
  %v225 = vpop.xlane.xlu0 %224
  %v226 = vsel %vm156, %v204, 0.0
  %227 = vadd.xlane.f32.xlu0 %v226
  %v228 = vpop.xlane.xlu0 %227
  %v229 = vrcp.pop %v207
  %v230 = vrcp.pop %v210
  %v231 = vrcp.pop %v213
  %v232 = vrcp.pop %v216
  %v233 = vrcp.pop %v219
  %v234 = vrcp.pop %v222
  %v235 = vrcp.pop %v225
  %v236 = vrcp.pop %v228
  %v237 = vmul.f32 %v190, %v229
  %v238 = vmul.f32 %v192, %v230
  %v239 = vmul.f32 %v194, %v231
  %v240 = vmul.f32 %v196, %v232
  %v241 = vmul.f32 %v198, %v233
  %v242 = vmul.f32 %v200, %v234
  %v243 = vmul.f32 %v202, %v235
  %v244 = vmul.f32 %v204, %v236
  %v245 = vsel %vm156, %v237, -inf
  %246 = vmax.xlane.f32.xlu0 %v245
  %v247 = vpop.xlane.xlu0 %246
  %v248 = vsel %vm156, %v238, -inf
  %249 = vmax.xlane.f32.xlu0 %v248
  %v250 = vpop.xlane.xlu0 %249
  %v251 = vsel %vm156, %v239, -inf
  %252 = vmax.xlane.f32.xlu0 %v251
  %v253 = vpop.xlane.xlu0 %252
  %v254 = vsel %vm156, %v240, -inf
  %255 = vmax.xlane.f32.xlu0 %v254
  %v256 = vpop.xlane.xlu0 %255
  %v257 = vsel %vm156, %v241, -inf
  %258 = vmax.xlane.f32.xlu0 %v257
  %v259 = vpop.xlane.xlu0 %258
  %v260 = vsel %vm156, %v242, -inf
  %261 = vmax.xlane.f32.xlu0 %v260
  %v262 = vpop.xlane.xlu0 %261
  %v263 = vsel %vm156, %v243, -inf
  %264 = vmax.xlane.f32.xlu0 %v263
  %v265 = vpop.xlane.xlu0 %264
  %v266 = vsel %vm156, %v244, -inf
  %267 = vmax.xlane.f32.xlu0 %v266
  %v268 = vpop.xlane.xlu0 %267
  %v269 = vlaneseq
  %v270 = vand.u32 %v269, 127
  %vm271 = vcmp.ge.f32.partialorder %v237, %v247
  %vm272 = vcmp.ge.f32.partialorder %v238, %v250
  %vm273 = vcmp.ge.f32.partialorder %v239, %v253
  %vm274 = vcmp.ge.f32.partialorder %v240, %v256
  %vm275 = vcmp.ge.f32.partialorder %v241, %v259
  %vm276 = vcmp.ge.f32.partialorder %v242, %v262
  %vm277 = vcmp.ge.f32.partialorder %v243, %v265
  %vm278 = vcmp.ge.f32.partialorder %v244, %v268
  %v279 = vsel %vm271, %v270, 4
  %v280 = vsel %vm272, %v270, 4
  %v281 = vsel %vm273, %v270, 4
  %v282 = vsel %vm274, %v270, 4
  %v283 = vsel %vm275, %v270, 4
  %v284 = vsel %vm276, %v270, 4
  %v285 = vsel %vm277, %v270, 4
  %v286 = vsel %vm278, %v270, 4
  %v287 = vsel %vm156, %v279, 2147483647
  %v288 = vand.u32 %v287, 65535
  %v289 = vshra.s32 %v287, 16
  %v290 = vcvt.s32.f32 %v288
  %v291 = vcvt.s32.f32 %v289
  %292 = vmin.xlane.f32.xlu0 %v291
  %v293 = vpop.xlane.xlu0 %292
  %vm294 = vcmp.eq.f32.partialorder %v291, %v293
  %v295 = vsel %vm294, %v290, inf
  %296 = vmin.xlane.f32.xlu0 %v295
  %v297 = vpop.xlane.xlu0 %296
  %v298 = vcvt.f32.s32 %v297
  %v299 = vcvt.f32.s32 %v293
  %v300 = vshll.u32 %v299, 16
  %v301 = vadd.s32 %v300, %v298
  %v302 = vsel %vm156, %v280, 2147483647
  %v303 = vand.u32 %v302, 65535
  %v304 = vshra.s32 %v302, 16
  %v305 = vcvt.s32.f32 %v303
  %v306 = vcvt.s32.f32 %v304
  %307 = vmin.xlane.f32.xlu0 %v306
  %v308 = vpop.xlane.xlu0 %307
  %vm309 = vcmp.eq.f32.partialorder %v306, %v308
  %v310 = vsel %vm309, %v305, inf
  %311 = vmin.xlane.f32.xlu0 %v310
  %v312 = vpop.xlane.xlu0 %311
  %v313 = vcvt.f32.s32 %v312
  %v314 = vcvt.f32.s32 %v308
  %v315 = vshll.u32 %v314, 16
  %v316 = vadd.s32 %v315, %v313
  %v317 = vsel %vm156, %v281, 2147483647
  %v318 = vand.u32 %v317, 65535
  %v319 = vshra.s32 %v317, 16
  %v320 = vcvt.s32.f32 %v318
  %v321 = vcvt.s32.f32 %v319
  %322 = vmin.xlane.f32.xlu0 %v321
  %v323 = vpop.xlane.xlu0 %322
  %vm324 = vcmp.eq.f32.partialorder %v321, %v323
  %v325 = vsel %vm324, %v320, inf
  %326 = vmin.xlane.f32.xlu0 %v325
  %v327 = vpop.xlane.xlu0 %326
  %v328 = vcvt.f32.s32 %v327
  %v329 = vcvt.f32.s32 %v323
  %v330 = vshll.u32 %v329, 16
  %v331 = vadd.s32 %v330, %v328
  %v332 = vsel %vm156, %v282, 2147483647
  %v333 = vand.u32 %v332, 65535
  %v334 = vshra.s32 %v332, 16
  %v335 = vcvt.s32.f32 %v333
  %v336 = vcvt.s32.f32 %v334
  %337 = vmin.xlane.f32.xlu0 %v336
  %v338 = vpop.xlane.xlu0 %337
  %vm339 = vcmp.eq.f32.partialorder %v336, %v338
  %v340 = vsel %vm339, %v335, inf
  %341 = vmin.xlane.f32.xlu0 %v340
  %v342 = vpop.xlane.xlu0 %341
  %v343 = vcvt.f32.s32 %v342
  %v344 = vcvt.f32.s32 %v338
  %v345 = vshll.u32 %v344, 16
  %v346 = vadd.s32 %v345, %v343
  %v347 = vsel %vm156, %v283, 2147483647
  %v348 = vand.u32 %v347, 65535
  %v349 = vshra.s32 %v347, 16
  %v350 = vcvt.s32.f32 %v348
  %v351 = vcvt.s32.f32 %v349
  %352 = vmin.xlane.f32.xlu0 %v351
  %v353 = vpop.xlane.xlu0 %352
  %vm354 = vcmp.eq.f32.partialorder %v351, %v353
  %v355 = vsel %vm354, %v350, inf
  %356 = vmin.xlane.f32.xlu0 %v355
  %v357 = vpop.xlane.xlu0 %356
  %v358 = vcvt.f32.s32 %v357
  %v359 = vcvt.f32.s32 %v353
  %v360 = vshll.u32 %v359, 16
  %v361 = vadd.s32 %v360, %v358
  %v362 = vsel %vm156, %v284, 2147483647
  %v363 = vand.u32 %v362, 65535
  %v364 = vshra.s32 %v362, 16
  %v365 = vcvt.s32.f32 %v363
  %v366 = vcvt.s32.f32 %v364
  %367 = vmin.xlane.f32.xlu0 %v366
  %v368 = vpop.xlane.xlu0 %367
  %vm369 = vcmp.eq.f32.partialorder %v366, %v368
  %v370 = vsel %vm369, %v365, inf
  %371 = vmin.xlane.f32.xlu0 %v370
  %v372 = vpop.xlane.xlu0 %371
  %v373 = vcvt.f32.s32 %v372
  %v374 = vcvt.f32.s32 %v368
  %v375 = vshll.u32 %v374, 16
  %v376 = vadd.s32 %v375, %v373
  %v377 = vsel %vm156, %v285, 2147483647
  %v378 = vand.u32 %v377, 65535
  %v379 = vshra.s32 %v377, 16
  %v380 = vcvt.s32.f32 %v378
  %v381 = vcvt.s32.f32 %v379
  %382 = vmin.xlane.f32.xlu0 %v381
  %v383 = vpop.xlane.xlu0 %382
  %vm384 = vcmp.eq.f32.partialorder %v381, %v383
  %v385 = vsel %vm384, %v380, inf
  %386 = vmin.xlane.f32.xlu0 %v385
  %v387 = vpop.xlane.xlu0 %386
  %v388 = vcvt.f32.s32 %v387
  %v389 = vcvt.f32.s32 %v383
  %v390 = vshll.u32 %v389, 16
  %v391 = vadd.s32 %v390, %v388
  %v392 = vsel %vm156, %v286, 2147483647
  %v393 = vand.u32 %v392, 65535
  %v394 = vshra.s32 %v392, 16
  %v395 = vcvt.s32.f32 %v393
  %v396 = vcvt.s32.f32 %v394
  %397 = vmin.xlane.f32.xlu0 %v396
  %v398 = vpop.xlane.xlu0 %397
  %vm399 = vcmp.eq.f32.partialorder %v396, %v398
  %v400 = vsel %vm399, %v395, inf
  %401 = vmin.xlane.f32.xlu0 %v400
  %v402 = vpop.xlane.xlu0 %401
  %v403 = vcvt.f32.s32 %v402
  %v404 = vcvt.f32.s32 %v398
  %v405 = vshll.u32 %v404, 16
  %v406 = vadd.s32 %v405, %v403
  %vm407 = vcmp.eq.s32.totalorder %v270, %v301
  %vm408 = vcmp.eq.s32.totalorder %v270, %v316
  %vm409 = vcmp.eq.s32.totalorder %v270, %v331
  %vm410 = vcmp.eq.s32.totalorder %v270, %v346
  %vm411 = vcmp.eq.s32.totalorder %v270, %v361
  %vm412 = vcmp.eq.s32.totalorder %v270, %v376
  %vm413 = vcmp.eq.s32.totalorder %v270, %v391
  %vm414 = vcmp.eq.s32.totalorder %v270, %v406
  %v415 = vsel %vm407, 1, 0
  %v416 = vsel %vm408, 1, 0
  %v417 = vsel %vm409, 1, 0
  %v418 = vsel %vm410, 1, 0
  %v419 = vsel %vm411, 1, 0
  %v420 = vsel %vm412, 1, 0
  %v421 = vsel %vm413, 1, 0
  %v422 = vsel %vm414, 1, 0
  %v423 = vcvt.s32.f32 %v415
  %v424 = vcvt.s32.f32 %v416
  %v425 = vcvt.s32.f32 %v417
  %v426 = vcvt.s32.f32 %v418
  %v427 = vcvt.s32.f32 %v419
  %v428 = vcvt.s32.f32 %v420
  %v429 = vcvt.s32.f32 %v421
  %v430 = vcvt.s32.f32 %v422
  %v431 = vlaneseq
  %v432 = vshrl.u32 %v431, 7
  %v433 = vadd.s32 %v432, 8
  %v434 = vadd.s32 %v432, 16
  %v435 = vadd.s32 %v432, 24
  %v436 = vadd.s32 %v432, 32
  %v437 = vadd.s32 %v432, 40
  %v438 = vadd.s32 %v432, 48
  %v439 = vadd.s32 %v432, 56
  %vm440 = vcmp.gt.s32.totalorder %v432, %v270
  %vm441 = vcmp.gt.s32.totalorder %v433, %v270
  %vm442 = vcmp.gt.s32.totalorder %v434, %v270
  %vm443 = vcmp.gt.s32.totalorder %v435, %v270
  %vm444 = vcmp.gt.s32.totalorder %v436, %v270
  %vm445 = vcmp.gt.s32.totalorder %v437, %v270
  %vm446 = vcmp.gt.s32.totalorder %v438, %v270
  %vm447 = vcmp.gt.s32.totalorder %v439, %v270
  %v448 = vsel %vm440, 1, 0
  %v449 = vsel %vm441, 1, 0
  %v450 = vsel %vm442, 1, 0
  %v451 = vsel %vm443, 1, 0
  %v452 = vsel %vm444, 1, 0
  %v453 = vsel %vm445, 1, 0
  %v454 = vsel %vm446, 1, 0
  %v455 = vsel %vm447, 1, 0
  %v456 = vcvt.s32.f32 %v448
  %v457 = vcvt.s32.f32 %v449
  %v458 = vcvt.s32.f32 %v450
  %v459 = vcvt.s32.f32 %v451
  %v460 = vcvt.s32.f32 %v452
  %v461 = vcvt.s32.f32 %v453
  %v462 = vcvt.s32.f32 %v454
  %v463 = vcvt.s32.f32 %v455
  %v464 = vld [vmem:[#allocation2] sm:$0x1]
  %v466 = vlaneseq
  %v467 = vshrl.u32 %v466, 7
  %v468 = vsub.s32 0, %v467
  %v469 = vrot.slane %v464, %v468
  %vm471 = vcmask 523264
  %v473 = vsel %vm471, %v456, 0
  %v476 = vsel %vm471, %v457, 0
  %v479 = vsel %vm471, %v458, 0
  %v482 = vsel %vm471, %v459, 0
  %v485 = vsel %vm471, %v460, 0
  %v488 = vsel %vm471, %v461, 0
  %v491 = vsel %vm471, %v462, 0
  %v494 = vsel %vm471, %v463, 0
  %496 = vmatprep.subr.mxu0 0.0
  %497 = vmatpush1.msra.mxu0 %v423
  %498 = vmatprep.subr.mxu0 0.0
  %499 = vmatpush1.msra.mxu0 %v424
  %500 = vmatprep.subr.mxu0 0.0
  %501 = vmatpush1.msra.mxu0 %v425
  %502 = vmatprep.subr.mxu0 0.0
  %503 = vmatpush1.msra.mxu0 %v426
  %504 = vmatprep.subr.mxu0 0.0
  %505 = vmatpush1.msra.mxu0 %v427
  %506 = vmatprep.subr.mxu0 0.0
  %507 = vmatpush1.msra.mxu0 %v428
  %508 = vmatprep.subr.mxu0 0.0
  %509 = vmatpush1.msra.mxu0 %v429
  %510 = vmatprep.subr.mxu0 0.0
  %511 = vmatpush1.msra.mxu0 %v430
  %512 = vmatprep.subr.mxu0 0.0
  %513 = vmatpush1.msra.mxu0 0.0
  %514 = vmatprep.subr.mxu0 0.0
  %515 = vmatpush1.msra.mxu0 0.0
  %516 = vmatprep.subr.mxu0 0.0
  %517 = vmatpush1.msra.mxu0 0.0
  %518 = vmatprep.subr.mxu0 0.0
  %519 = vmatpush1.msra.mxu0 0.0
  %520 = vmatprep.subr.mxu0 0.0
  %521 = vmatpush1.msra.mxu0 0.0
  %522 = vmatprep.subr.mxu0 0.0
  %523 = vmatpush1.msra.mxu0 0.0
  %524 = vmatprep.subr.mxu0 0.0
  %525 = vmatpush1.msra.mxu0 0.0
  %526 = vmatprep.subr.mxu0 0.0
  %527 = vmatpush1.msra.mxu0 0.0
  %528 = vmatprep.subr.mxu0 0.0
  %529 = vmatpush1.msra.mxu0 0.0
  %530 = vmatprep.subr.mxu0 0.0
  %531 = vmatpush1.msra.mxu0 0.0
  %532 = vmatprep.subr.mxu0 0.0
  %533 = vmatpush1.msra.mxu0 0.0
  %534 = vmatprep.subr.mxu0 0.0
  %535 = vmatpush1.msra.mxu0 0.0
  %536 = vmatprep.subr.mxu0 0.0
  %537 = vmatpush1.msra.mxu0 0.0
  %538 = vmatprep.subr.mxu0 0.0
  %539 = vmatpush1.msra.mxu0 0.0
  %540 = vmatprep.subr.mxu0 0.0
  %541 = vmatpush1.msra.mxu0 0.0
  %542 = vmatprep.subr.mxu0 0.0
  %543 = vmatpush1.msra.mxu0 0.0
  %544 = vmatprep.subr.mxu0 0.0
  %545 = vmatpush1.msra.mxu0 0.0
  %546 = vmatprep.subr.mxu0 0.0
  %547 = vmatpush1.msra.mxu0 0.0
  %548 = vmatprep.subr.mxu0 0.0
  %549 = vmatpush1.msra.mxu0 0.0
  %550 = vmatprep.subr.mxu0 0.0
  %551 = vmatpush1.msra.mxu0 0.0
  %552 = vmatprep.subr.mxu0 0.0
  %553 = vmatpush1.msra.mxu0 0.0
  %554 = vmatprep.subr.mxu0 0.0
  %555 = vmatpush1.msra.mxu0 0.0
  %556 = vmatprep.subr.mxu0 0.0
  %557 = vmatpush1.msra.mxu0 0.0
  %558 = vmatprep.subr.mxu0 0.0
  %559 = vmatpush1.msra.mxu0 0.0
  %560 = vmatprep.mubr.f32.mxu0 0.0
  %561 = vmatmul.mubr.f32.gmra.mrb[0].mxu0 %v473
  %v562 = vpop.f32.mrb[0].mxu0
  %v563 = vadd.f32 %v469, %v562
  %v564 = vpop.f32.mrb[0].mxu0
  %565 = vmatprep.mubr.f32.mxu0 0.0
  %566 = vmatmul.mubr.f32.gmra.mrb[0].mxu0 %v476
  %v567 = vpop.f32.mrb[0].mxu0
  %v568 = vadd.f32 %v469, %v567
  %v569 = vpop.f32.mrb[0].mxu0
  %570 = vmatprep.mubr.f32.mxu0 0.0
  %571 = vmatmul.mubr.f32.gmra.mrb[0].mxu0 %v479
  %v572 = vpop.f32.mrb[0].mxu0
  %v573 = vadd.f32 %v469, %v572
  %v574 = vpop.f32.mrb[0].mxu0
  %575 = vmatprep.mubr.f32.mxu0 0.0
  %576 = vmatmul.mubr.f32.gmra.mrb[0].mxu0 %v482
  %v577 = vpop.f32.mrb[0].mxu0
  %v578 = vadd.f32 %v469, %v577
  %v579 = vpop.f32.mrb[0].mxu0
  %580 = vmatprep.mubr.f32.mxu0 0.0
  %581 = vmatmul.mubr.f32.gmra.mrb[0].mxu0 %v485
  %v582 = vpop.f32.mrb[0].mxu0
  %v583 = vadd.f32 %v469, %v582
  %v584 = vpop.f32.mrb[0].mxu0
  %585 = vmatprep.mubr.f32.mxu0 0.0
  %586 = vmatmul.mubr.f32.gmra.mrb[0].mxu0 %v488
  %v587 = vpop.f32.mrb[0].mxu0
  %v588 = vadd.f32 %v469, %v587
  %v589 = vpop.f32.mrb[0].mxu0
  %590 = vmatprep.mubr.f32.mxu0 0.0
  %591 = vmatmul.mubr.f32.gmra.mrb[0].mxu0 %v491
  %v592 = vpop.f32.mrb[0].mxu0
  %v593 = vadd.f32 %v469, %v592
  %v594 = vpop.f32.mrb[0].mxu0
  %595 = vmatprep.mubr.f32.mxu0 0.0
  %596 = vmatmul.mubr.f32.gmra.mrb[0].mxu0 %v494
  %v597 = vpop.f32.mrb[0].mxu0
  %v598 = vadd.f32 %v469, %v597
  %v599 = vpop.f32.mrb[0].mxu0
  %600 = vdwg.mxu0
  %v601 = vmul.f32 %v423, %v563
  %v602 = vmul.f32 %v424, %v568
  %v603 = vmul.f32 %v425, %v573
  %v604 = vmul.f32 %v426, %v578
  %v605 = vmul.f32 %v427, %v583
  %v606 = vmul.f32 %v428, %v588
  %v607 = vmul.f32 %v429, %v593
  %v608 = vmul.f32 %v430, %v598
  %v609 = vsel %vm156, %v601, 0.0
  %610 = vadd.xlane.f32.xlu0 %v609
  %v611 = vpop.xlane.xlu0 %610
  %v612 = vsel %vm156, %v602, 0.0
  %613 = vadd.xlane.f32.xlu0 %v612
  %v614 = vpop.xlane.xlu0 %613
  %v615 = vsel %vm156, %v603, 0.0
  %616 = vadd.xlane.f32.xlu0 %v615
  %v617 = vpop.xlane.xlu0 %616
  %v618 = vsel %vm156, %v604, 0.0
  %619 = vadd.xlane.f32.xlu0 %v618
  %v620 = vpop.xlane.xlu0 %619
  %v621 = vsel %vm156, %v605, 0.0
  %622 = vadd.xlane.f32.xlu0 %v621
  %v623 = vpop.xlane.xlu0 %622
  %v624 = vsel %vm156, %v606, 0.0
  %625 = vadd.xlane.f32.xlu0 %v624
  %v626 = vpop.xlane.xlu0 %625
  %v627 = vsel %vm156, %v607, 0.0
  %628 = vadd.xlane.f32.xlu0 %v627
  %v629 = vpop.xlane.xlu0 %628
  %v630 = vsel %vm156, %v608, 0.0
  %631 = vadd.xlane.f32.xlu0 %v630
  %v632 = vpop.xlane.xlu0 %631
  %vm633 = vcmp.lt.f32.partialorder %v611, 32.0
  %vm634 = vcmp.lt.f32.partialorder %v614, 32.0
  %vm635 = vcmp.lt.f32.partialorder %v617, 32.0
  %vm636 = vcmp.lt.f32.partialorder %v620, 32.0
  %vm637 = vcmp.lt.f32.partialorder %v623, 32.0
  %vm638 = vcmp.lt.f32.partialorder %v626, 32.0
  %vm639 = vcmp.lt.f32.partialorder %v629, 32.0
  %vm640 = vcmp.lt.f32.partialorder %v632, 32.0
  %v641 = vsel %vm633, 1, 0
  %v642 = vsel %vm634, 1, 0
  %v643 = vsel %vm635, 1, 0
  %v644 = vsel %vm636, 1, 0
  %v645 = vsel %vm637, 1, 0
  %v646 = vsel %vm638, 1, 0
  %v647 = vsel %vm639, 1, 0
  %v648 = vsel %vm640, 1, 0
  %v649 = vcvt.s32.f32 %v641
  %v650 = vcvt.s32.f32 %v642
  %v651 = vcvt.s32.f32 %v643
  %v652 = vcvt.s32.f32 %v644
  %v653 = vcvt.s32.f32 %v645
  %v654 = vcvt.s32.f32 %v646
  %v655 = vcvt.s32.f32 %v647
  %v656 = vcvt.s32.f32 %v648
  %v657 = vsel %vm156, %v423, 0.0
  %v658 = vsel %vm156, %v424, 0.0
  %v659 = vadd.f32 %v657, %v658
  %v660 = vsel %vm156, %v425, 0.0
  %v661 = vadd.f32 %v659, %v660
  %v662 = vsel %vm156, %v426, 0.0
  %v663 = vadd.f32 %v661, %v662
  %v664 = vsel %vm156, %v427, 0.0
  %v665 = vadd.f32 %v663, %v664
  %v666 = vsel %vm156, %v428, 0.0
  %v667 = vadd.f32 %v665, %v666
  %v668 = vsel %vm156, %v429, 0.0
  %v669 = vadd.f32 %v667, %v668
  %v670 = vsel %vm156, %v430, 0.0
  %v671 = vadd.f32 %v669, %v670
  %v672 = vrot.slane %v671, 4
  %v673 = vadd.f32 %v671, %v672
  %v674 = vrot.slane %v673, 2
  %v675 = vadd.f32 %v673, %v674
  %v676 = vrot.slane %v675, 1
  %v677 = vadd.f32 %v675, %v676
  %v678 = vadd.f32 %v464, %v677
  %vm679 = vcmask 24576
  %680 = vst.msk [vmem:[#allocation2] sm:$0x1] %vm679, %v678
  %v681 = vmul.f32 %v649, %v247
  %v682 = vmul.f32 %v650, %v250
  %v683 = vmul.f32 %v651, %v253
  %v684 = vmul.f32 %v652, %v256
  %v685 = vmul.f32 %v653, %v259
  %v686 = vmul.f32 %v654, %v262
  %v687 = vmul.f32 %v655, %v265
  %v688 = vmul.f32 %v656, %v268
  %v689 = vsub.f32 1.0, %v649
  %v690 = vsub.f32 1.0, %v650
  %v691 = vsub.f32 1.0, %v651
  %v692 = vsub.f32 1.0, %v652
  %v693 = vsub.f32 1.0, %v653
  %v694 = vsub.f32 1.0, %v654
  %v695 = vsub.f32 1.0, %v655
  %v696 = vsub.f32 1.0, %v656
  %vm697 = vcmp.eq.s32.totalorder %v270, 0
  %vm698 = vcmp.eq.s32.totalorder %v270, 1
  %v699 = vsel %vm698, %v689, 0.0
  %v700 = vsel %vm698, %v690, 0.0
  %v701 = vsel %vm698, %v691, 0.0
  %v702 = vsel %vm698, %v692, 0.0
  %v703 = vsel %vm698, %v693, 0.0
  %v704 = vsel %vm698, %v694, 0.0
  %v705 = vsel %vm698, %v695, 0.0
  %v706 = vsel %vm698, %v696, 0.0
  %v707 = vsel %vm697, %v681, %v699
  %v708 = vsel %vm697, %v682, %v700
  %v709 = vsel %vm697, %v683, %v701
  %v710 = vsel %vm697, %v684, %v702
  %v711 = vsel %vm697, %v685, %v703
  %v712 = vsel %vm697, %v686, %v704
  %v713 = vsel %vm697, %v687, %v705
  %v714 = vsel %vm697, %v688, %v706
  %vm715 = vcmask 64512
  %716 = vst.msk [vmem:[%s3] sm:$0xff] %vm715, %v707
  %717 = vst.msk [vmem:[%s3 + $0x8] sm:$0xff] %vm715, %v708
  %718 = vst.msk [vmem:[%s3 + $0x10] sm:$0xff] %vm715, %v709
  %719 = vst.msk [vmem:[%s3 + $0x18] sm:$0xff] %vm715, %v710
  %720 = vst.msk [vmem:[%s3 + $0x20] sm:$0xff] %vm715, %v711
  %721 = vst.msk [vmem:[%s3 + $0x28] sm:$0xff] %vm715, %v712
  %722 = vst.msk [vmem:[%s3 + $0x30] sm:$0xff] %vm715, %v713
  %723 = vst.msk [vmem:[%s3 + $0x38] sm:$0xff] %vm715, %v714
  // Predicated region
  $region18: #{intra_node_moe_forward.2} parent=0 // pred_check
    _
  $region19: #{intra_node_moe_forward.2} parent=0 // pred_check_branch
    %725 = sbr.rel (0) target = $region21
  $region20: #{intra_node_moe_forward.2} parent=0 // pred_region
    _
  $region21: #{intra_node_moe_forward.2} parent=0 // pred_fallthru
    _
  // Predicated region
  $region22: #{intra_node_moe_forward.2} parent=0 // pred_check
    _
  $region23: #{intra_node_moe_forward.2} parent=0 // pred_check_branch
    %727 = sbr.rel (0) target = $region25
  $region24: #{intra_node_moe_forward.2} parent=0 // pred_region
    _
  $region25: #{intra_node_moe_forward.2} parent=0 // pred_fallthru
    _

// kernel: intra_node_moe_forward.3
$region0: #{intra_node_moe_forward.3}
  #allocation0 [shape = 'u32[]', space=smem, size = 0x4, offset = 0x4, fixed_abs, tag = 'smem constant byte address 0x4 - core index']
  #allocation1 [shape = 'u32[144,128]{1,0:T(1,128)}', space=vmem, size = 0x12000, scoped, tag = 'internal scratch']
  %s0 = inlined_call_operand.vmem [shape: f32[64,128], index: 0, kind: input, shape index: {}]
  %s1 = inlined_call_operand.vmem [shape: f32[64,8], index: 1, kind: input, shape index: {}]
  %s2 = inlined_call_operand.vmem [shape: bf16[128,256], index: 2, kind: input, shape index: {}]
  %s3 = inlined_call_operand.vmem [shape: f32[1,256], index: 3, kind: input, shape index: {}]
  %s4 = inlined_call_operand.vmem [shape: bf16[256,128], index: 4, kind: input, shape index: {}]
  %s5 = inlined_call_operand.vmem [shape: f32[1,128], index: 5, kind: input, shape index: {}]
  %s6 = inlined_call_operand.hbm [shape: f32[64,128], index: 6, kind: output, shape index: {}]
  %s7 = sld [smem:[#allocation0]]
  $region34: #{intra_node_moe_forward.3} parent=0
    _
  %s9 = ssub.s32 1, %s7
  %s10 = scalar_select 0, %s9, %s7
  $region1: #{intra_node_moe_forward.3} parent=0
    #allocation2 [shape = 'u8[32768]{0}', space=vmem, size = 0x8000, scoped, tag = 'output window, operand 0, single buffered']
    #allocation3 [shape = 's32[1]{0}', space=sflag, size = 0x4, scoped, tag = 'scoped memory for intra_node_moe_forward.3']
    %11 = vsyncpa [#allocation3], 0
    // Predicated region
    $region2: #{intra_node_moe_forward.3} parent=1 // pred_check
      _
    $region3: #{intra_node_moe_forward.3} parent=1 // pred_check_branch
      %13 = sbr.rel (0) target = $region5
    $region4: #{intra_node_moe_forward.3} parent=1 // pred_region
      _
    $region5: #{intra_node_moe_forward.3} parent=1 // pred_fallthru
      _
    // Predicated region
    $region6: #{intra_node_moe_forward.3} parent=1 // pred_check
      _
    $region7: #{intra_node_moe_forward.3} parent=1 // pred_check_branch
      %15 = sbr.rel (0) target = $region9
    $region8: #{intra_node_moe_forward.3} parent=1 // pred_region
      _
    $region9: #{intra_node_moe_forward.3} parent=1 // pred_fallthru
      _
    // Predicated region
    $region10: #{intra_node_moe_forward.3} parent=1 // pred_check
      _
    $region11: #{intra_node_moe_forward.3} parent=1 // pred_check_branch
      %17 = sbr.rel (0) target = $region13
    $region12: #{intra_node_moe_forward.3} parent=1 // pred_region
      _
    $region13: #{intra_node_moe_forward.3} parent=1 // pred_fallthru
      _
    // Predicated region
    $region14: #{intra_node_moe_forward.3} parent=1 // pred_check
      _
    $region15: #{intra_node_moe_forward.3} parent=1 // pred_check_branch
      %19 = sbr.rel (0) target = $region17
    $region16: #{intra_node_moe_forward.3} parent=1 // pred_region
      _
    $region17: #{intra_node_moe_forward.3} parent=1 // pred_fallthru
      _
    // Predicated region
    $region18: #{intra_node_moe_forward.3} parent=1 // pred_check
      _
    $region19: #{intra_node_moe_forward.3} parent=1 // pred_check_branch
      %21 = sbr.rel (0) target = $region21
    $region20: #{intra_node_moe_forward.3} parent=1 // pred_region
      _
    $region21: #{intra_node_moe_forward.3} parent=1 // pred_fallthru
      _
    // Predicated region
    $region22: #{intra_node_moe_forward.3} parent=1 // pred_check
      _
    $region23: #{intra_node_moe_forward.3} parent=1 // pred_check_branch
      %23 = sbr.rel (0) target = $region25
    $region24: #{intra_node_moe_forward.3} parent=1 // pred_region
      _
    $region25: #{intra_node_moe_forward.3} parent=1 // pred_fallthru
      _
    %v25 = vld [vmem:[%s0] sm:$0xff]
    %v26 = vld [vmem:[%s0 + $0x8] sm:$0xff]
    %v27 = vld [vmem:[%s0 + $0x10] sm:$0xff]
    %v28 = vld [vmem:[%s0 + $0x18] sm:$0xff]
    %v29 = vld [vmem:[%s0 + $0x20] sm:$0xff]
    %v30 = vld [vmem:[%s0 + $0x28] sm:$0xff]
    %v31 = vld [vmem:[%s0 + $0x30] sm:$0xff]
    %v32 = vld [vmem:[%s0 + $0x38] sm:$0xff]
    %v33 = vpack.c.bf16 %v26, %v25
    %v34 = vpack.c.bf16 %v28, %v27
    %v35 = vpack.c.bf16 %v30, %v29
    %v36 = vpack.c.bf16 %v32, %v31
    %v37 = vld [vmem:[%s2] sm:$0xff]
    %v38 = vld [vmem:[%s2 + $0x8] sm:$0xff]
    %v39 = vld [vmem:[%s2 + $0x10] sm:$0xff]
    %v40 = vld [vmem:[%s2 + $0x18] sm:$0xff]
    %v41 = vld [vmem:[%s2 + $0x20] sm:$0xff]
    %v42 = vld [vmem:[%s2 + $0x28] sm:$0xff]
    %v43 = vld [vmem:[%s2 + $0x30] sm:$0xff]
    %v44 = vld [vmem:[%s2 + $0x38] sm:$0xff]
    %v45 = vld [vmem:[%s2 + $0x40] sm:$0xff]
    %v46 = vld [vmem:[%s2 + $0x48] sm:$0xff]
    %v47 = vld [vmem:[%s2 + $0x50] sm:$0xff]
    %v48 = vld [vmem:[%s2 + $0x58] sm:$0xff]
    %v49 = vld [vmem:[%s2 + $0x60] sm:$0xff]
    %v50 = vld [vmem:[%s2 + $0x68] sm:$0xff]
    %v51 = vld [vmem:[%s2 + $0x70] sm:$0xff]
    %v52 = vld [vmem:[%s2 + $0x78] sm:$0xff]
    %v53 = vld [vmem:[%s3] sm:$0x3]
    %v55 = vlaneseq
    %v56 = vshrl.u32 %v55, 7
    %v57 = vsub.s32 0, %v56
    %v58 = vrot.slane %v53, %v57
    %v59 = vlaneseq
    %v60 = vshrl.u32 %v59, 7
    %v61 = vsub.s32 1, %v60
    %v62 = vrot.slane %v53, %v61
    %v81 = vunpack.c.l.b16 %v37
    %v82 = vunpack.c.h.b16 %v37
    %v83 = vunpack.c.l.b16 %v38
    %v84 = vunpack.c.h.b16 %v38
    %v85 = vunpack.c.l.b16 %v39
    %v86 = vunpack.c.h.b16 %v39
    %v87 = vunpack.c.l.b16 %v40
    %v88 = vunpack.c.h.b16 %v40
    %v89 = vunpack.c.l.b16 %v41
    %v90 = vunpack.c.h.b16 %v41
    %v91 = vunpack.c.l.b16 %v42
    %v92 = vunpack.c.h.b16 %v42
    %v93 = vunpack.c.l.b16 %v43
    %v94 = vunpack.c.h.b16 %v43
    %v95 = vunpack.c.l.b16 %v44
    %v96 = vunpack.c.h.b16 %v44
    %v97 = vunpack.c.l.b16 %v45
    %v98 = vunpack.c.h.b16 %v45
    %v99 = vunpack.c.l.b16 %v46
    %v100 = vunpack.c.h.b16 %v46
    %v101 = vunpack.c.l.b16 %v47
    %v102 = vunpack.c.h.b16 %v47
    %v103 = vunpack.c.l.b16 %v48
    %v104 = vunpack.c.h.b16 %v48
    %v105 = vunpack.c.l.b16 %v49
    %v106 = vunpack.c.h.b16 %v49
    %v107 = vunpack.c.l.b16 %v50
    %v108 = vunpack.c.h.b16 %v50
    %v109 = vunpack.c.l.b16 %v51
    %v110 = vunpack.c.h.b16 %v51
    %v111 = vunpack.c.l.b16 %v52
    %v112 = vunpack.c.h.b16 %v52
    %v113 = vpack.c.b16 %v83, %v81
    %v114 = vpack.c.b16 %v84, %v82
    %v115 = vpack.c.b16 %v87, %v85
    %v116 = vpack.c.b16 %v88, %v86
    %v117 = vpack.c.b16 %v91, %v89
    %v118 = vpack.c.b16 %v92, %v90
    %v119 = vpack.c.b16 %v95, %v93
    %v120 = vpack.c.b16 %v96, %v94
    %v121 = vpack.c.b16 %v99, %v97
    %v122 = vpack.c.b16 %v100, %v98
    %v123 = vpack.c.b16 %v103, %v101
    %v124 = vpack.c.b16 %v104, %v102
    %v125 = vpack.c.b16 %v107, %v105
    %v126 = vpack.c.b16 %v108, %v106
    %v127 = vpack.c.b16 %v111, %v109
    %v128 = vpack.c.b16 %v112, %v110
    %145 = vmatprep.subr.bf16.mxu0 %v114
    %146 = vmatpush1.bf16.msra.mxu0 %v113
    %147 = vmatprep.subr.bf16.mxu0 %v116
    %148 = vmatpush1.bf16.msra.mxu0 %v115
    %149 = vmatprep.subr.bf16.mxu0 %v118
    %150 = vmatpush1.bf16.msra.mxu0 %v117
    %151 = vmatprep.subr.bf16.mxu0 %v120
    %152 = vmatpush1.bf16.msra.mxu0 %v119
    %153 = vmatprep.subr.bf16.mxu0 %v122
    %154 = vmatpush1.bf16.msra.mxu0 %v121
    %155 = vmatprep.subr.bf16.mxu0 %v124
    %156 = vmatpush1.bf16.msra.mxu0 %v123
    %157 = vmatprep.subr.bf16.mxu0 %v126
    %158 = vmatpush1.bf16.msra.mxu0 %v125
    %159 = vmatprep.subr.bf16.mxu0 %v128
    %160 = vmatpush1.bf16.msra.mxu0 %v127
    %161 = vmatprep.subr.bf16.mxu0 0
    %162 = vmatpush1.bf16.msra.mxu0 0
    %163 = vmatprep.subr.bf16.mxu0 0
    %164 = vmatpush1.bf16.msra.mxu0 0
    %165 = vmatprep.subr.bf16.mxu0 0
    %166 = vmatpush1.bf16.msra.mxu0 0
    %167 = vmatprep.subr.bf16.mxu0 0
    %168 = vmatpush1.bf16.msra.mxu0 0
    %169 = vmatprep.subr.bf16.mxu0 0
    %170 = vmatpush1.bf16.msra.mxu0 0
    %171 = vmatprep.subr.bf16.mxu0 0
    %172 = vmatpush1.bf16.msra.mxu0 0
    %173 = vmatprep.subr.bf16.mxu0 0
    %174 = vmatpush1.bf16.msra.mxu0 0
    %175 = vmatprep.subr.bf16.mxu0 0
    %176 = vmatpush1.bf16.msra.mxu0 0
    %177 = vmatprep.mubr.bf16.mxu0 0
    %178 = vmatmul.mubr.bf16.gmra.mrb[0].mxu0 %v33
    %v179 = vpop.f32.mrb[0].mxu0
    %v180 = vadd.f32 %v58, %v179
    %v181 = vpop.f32.mrb[0].mxu0
    %v182 = vadd.f32 %v62, %v181
    %v183 = vpop.f32.mrb[0].mxu0
    %v184 = vadd.f32 %v58, %v183
    %v185 = vpop.f32.mrb[0].mxu0
    %v186 = vadd.f32 %v62, %v185
    %187 = vmatprep.mubr.bf16.mxu0 0
    %188 = vmatmul.mubr.bf16.gmra.mrb[0].mxu0 %v34
    %v189 = vpop.f32.mrb[0].mxu0
    %v190 = vadd.f32 %v58, %v189
    %v191 = vpop.f32.mrb[0].mxu0
    %v192 = vadd.f32 %v62, %v191
    %v193 = vpop.f32.mrb[0].mxu0
    %v194 = vadd.f32 %v58, %v193
    %v195 = vpop.f32.mrb[0].mxu0
    %v196 = vadd.f32 %v62, %v195
    %197 = vmatprep.mubr.bf16.mxu0 0
    %198 = vmatmul.mubr.bf16.gmra.mrb[0].mxu0 %v35
    %v199 = vpop.f32.mrb[0].mxu0
    %v200 = vadd.f32 %v58, %v199
    %v201 = vpop.f32.mrb[0].mxu0
    %v202 = vadd.f32 %v62, %v201
    %v203 = vpop.f32.mrb[0].mxu0
    %v204 = vadd.f32 %v58, %v203
    %v205 = vpop.f32.mrb[0].mxu0
    %v206 = vadd.f32 %v62, %v205
    %207 = vmatprep.mubr.bf16.mxu0 0
    %208 = vmatmul.mubr.bf16.gmra.mrb[0].mxu0 %v36
    %v209 = vpop.f32.mrb[0].mxu0
    %v210 = vadd.f32 %v58, %v209
    %v211 = vpop.f32.mrb[0].mxu0
    %v212 = vadd.f32 %v62, %v211
    %v213 = vpop.f32.mrb[0].mxu0
    %v214 = vadd.f32 %v58, %v213
    %v215 = vpop.f32.mrb[0].mxu0
    %v216 = vadd.f32 %v62, %v215
    %217 = vdwg.mxu0
    %v218 = vmul.f32 %v180, %v180
    %v219 = vmul.f32 %v182, %v182
    %v220 = vmul.f32 %v184, %v184
    %v221 = vmul.f32 %v186, %v186
    %v222 = vmul.f32 %v190, %v190
    %v223 = vmul.f32 %v192, %v192
    %v224 = vmul.f32 %v194, %v194
    %v225 = vmul.f32 %v196, %v196
    %v226 = vmul.f32 %v200, %v200
    %v227 = vmul.f32 %v202, %v202
    %v228 = vmul.f32 %v204, %v204
    %v229 = vmul.f32 %v206, %v206
    %v230 = vmul.f32 %v210, %v210
    %v231 = vmul.f32 %v212, %v212
    %v232 = vmul.f32 %v214, %v214
    %v233 = vmul.f32 %v216, %v216
    %v234 = vmul.f32 %v180, %v218
    %v235 = vmul.f32 %v182, %v219
    %v236 = vmul.f32 %v184, %v220
    %v237 = vmul.f32 %v186, %v221
    %v238 = vmul.f32 %v190, %v222
    %v239 = vmul.f32 %v192, %v223
    %v240 = vmul.f32 %v194, %v224
    %v241 = vmul.f32 %v196, %v225
    %v242 = vmul.f32 %v200, %v226
    %v243 = vmul.f32 %v202, %v227
    %v244 = vmul.f32 %v204, %v228
    %v245 = vmul.f32 %v206, %v229
    %v246 = vmul.f32 %v210, %v230
    %v247 = vmul.f32 %v212, %v231
    %v248 = vmul.f32 %v214, %v232
    %v249 = vmul.f32 %v216, %v233
    %v250 = vmul.f32 %v234, 0.044715
    %v251 = vmul.f32 %v235, 0.044715
    %v252 = vmul.f32 %v236, 0.044715
    %v253 = vmul.f32 %v237, 0.044715
    %v254 = vmul.f32 %v238, 0.044715
    %v255 = vmul.f32 %v239, 0.044715
    %v256 = vmul.f32 %v240, 0.044715
    %v257 = vmul.f32 %v241, 0.044715
    %v258 = vmul.f32 %v242, 0.044715
    %v259 = vmul.f32 %v243, 0.044715
    %v260 = vmul.f32 %v244, 0.044715
    %v261 = vmul.f32 %v245, 0.044715
    %v262 = vmul.f32 %v246, 0.044715
    %v263 = vmul.f32 %v247, 0.044715
    %v264 = vmul.f32 %v248, 0.044715
    %v265 = vmul.f32 %v249, 0.044715
    %v266 = vadd.f32 %v180, %v250
    %v267 = vadd.f32 %v182, %v251
    %v268 = vadd.f32 %v184, %v252
    %v269 = vadd.f32 %v186, %v253
    %v270 = vadd.f32 %v190, %v254
    %v271 = vadd.f32 %v192, %v255
    %v272 = vadd.f32 %v194, %v256
    %v273 = vadd.f32 %v196, %v257
    %v274 = vadd.f32 %v200, %v258
    %v275 = vadd.f32 %v202, %v259
    %v276 = vadd.f32 %v204, %v260
    %v277 = vadd.f32 %v206, %v261
    %v278 = vadd.f32 %v210, %v262
    %v279 = vadd.f32 %v212, %v263
    %v280 = vadd.f32 %v214, %v264
    %v281 = vadd.f32 %v216, %v265
    %v282 = vmul.f32 %v266, 0.7978846
    %v283 = vmul.f32 %v267, 0.7978846
    %v284 = vmul.f32 %v268, 0.7978846
    %v285 = vmul.f32 %v269, 0.7978846
    %v286 = vmul.f32 %v270, 0.7978846
    %v287 = vmul.f32 %v271, 0.7978846
    %v288 = vmul.f32 %v272, 0.7978846
    %v289 = vmul.f32 %v273, 0.7978846
    %v290 = vmul.f32 %v274, 0.7978846
    %v291 = vmul.f32 %v275, 0.7978846
    %v292 = vmul.f32 %v276, 0.7978846
    %v293 = vmul.f32 %v277, 0.7978846
    %v294 = vmul.f32 %v278, 0.7978846
    %v295 = vmul.f32 %v279, 0.7978846
    %v296 = vmul.f32 %v280, 0.7978846
    %v297 = vmul.f32 %v281, 0.7978846
    %v298 = vtanh.pop %v282
    %v299 = vtanh.pop %v283
    %v300 = vtanh.pop %v284
    %v301 = vtanh.pop %v285
    %v302 = vtanh.pop %v286
    %v303 = vtanh.pop %v287
    %v304 = vtanh.pop %v288
    %v305 = vtanh.pop %v289
    %v306 = vtanh.pop %v290
    %v307 = vtanh.pop %v291
    %v308 = vtanh.pop %v292
    %v309 = vtanh.pop %v293
    %v310 = vtanh.pop %v294
    %v311 = vtanh.pop %v295
    %v312 = vtanh.pop %v296
    %v313 = vtanh.pop %v297
    %v314 = vadd.f32 %v298, 1.0
    %v315 = vadd.f32 %v299, 1.0
    %v316 = vadd.f32 %v300, 1.0
    %v317 = vadd.f32 %v301, 1.0
    %v318 = vadd.f32 %v302, 1.0
    %v319 = vadd.f32 %v303, 1.0
    %v320 = vadd.f32 %v304, 1.0
    %v321 = vadd.f32 %v305, 1.0
    %v322 = vadd.f32 %v306, 1.0
    %v323 = vadd.f32 %v307, 1.0
    %v324 = vadd.f32 %v308, 1.0
    %v325 = vadd.f32 %v309, 1.0
    %v326 = vadd.f32 %v310, 1.0
    %v327 = vadd.f32 %v311, 1.0
    %v328 = vadd.f32 %v312, 1.0
    %v329 = vadd.f32 %v313, 1.0
    %v330 = vmul.f32 %v314, 0.5
    %v331 = vmul.f32 %v315, 0.5
    %v332 = vmul.f32 %v316, 0.5
    %v333 = vmul.f32 %v317, 0.5
    %v334 = vmul.f32 %v318, 0.5
    %v335 = vmul.f32 %v319, 0.5
    %v336 = vmul.f32 %v320, 0.5
    %v337 = vmul.f32 %v321, 0.5
    %v338 = vmul.f32 %v322, 0.5
    %v339 = vmul.f32 %v323, 0.5
    %v340 = vmul.f32 %v324, 0.5
    %v341 = vmul.f32 %v325, 0.5
    %v342 = vmul.f32 %v326, 0.5
    %v343 = vmul.f32 %v327, 0.5
    %v344 = vmul.f32 %v328, 0.5
    %v345 = vmul.f32 %v329, 0.5
    %v346 = vmul.f32 %v180, %v330
    %v347 = vmul.f32 %v182, %v331
    %v348 = vmul.f32 %v184, %v332
    %v349 = vmul.f32 %v186, %v333
    %v350 = vmul.f32 %v190, %v334
    %v351 = vmul.f32 %v192, %v335
    %v352 = vmul.f32 %v194, %v336
    %v353 = vmul.f32 %v196, %v337
    %v354 = vmul.f32 %v200, %v338
    %v355 = vmul.f32 %v202, %v339
    %v356 = vmul.f32 %v204, %v340
    %v357 = vmul.f32 %v206, %v341
    %v358 = vmul.f32 %v210, %v342
    %v359 = vmul.f32 %v212, %v343
    %v360 = vmul.f32 %v214, %v344
    %v361 = vmul.f32 %v216, %v345
    %v362 = vpack.c.bf16 %v348, %v346
    %v363 = vpack.c.bf16 %v349, %v347
    %v364 = vpack.c.bf16 %v352, %v350
    %v365 = vpack.c.bf16 %v353, %v351
    %v366 = vpack.c.bf16 %v356, %v354
    %v367 = vpack.c.bf16 %v357, %v355
    %v368 = vpack.c.bf16 %v360, %v358
    %v369 = vpack.c.bf16 %v361, %v359
    %v370 = vld [vmem:[%s4] sm:$0xf]
    %v371 = vld [vmem:[%s4 + $0x4] sm:$0xf]
    %v372 = vld [vmem:[%s4 + $0x8] sm:$0xf]
    %v373 = vld [vmem:[%s4 + $0xc] sm:$0xf]
    %v374 = vld [vmem:[%s4 + $0x10] sm:$0xf]
    %v375 = vld [vmem:[%s4 + $0x14] sm:$0xf]
    %v376 = vld [vmem:[%s4 + $0x18] sm:$0xf]
    %v377 = vld [vmem:[%s4 + $0x1c] sm:$0xf]
    %v378 = vld [vmem:[%s4 + $0x20] sm:$0xf]
    %v379 = vld [vmem:[%s4 + $0x24] sm:$0xf]
    %v380 = vld [vmem:[%s4 + $0x28] sm:$0xf]
    %v381 = vld [vmem:[%s4 + $0x2c] sm:$0xf]
    %v382 = vld [vmem:[%s4 + $0x30] sm:$0xf]
    %v383 = vld [vmem:[%s4 + $0x34] sm:$0xf]
    %v384 = vld [vmem:[%s4 + $0x38] sm:$0xf]
    %v385 = vld [vmem:[%s4 + $0x3c] sm:$0xf]
    %v386 = vld [vmem:[%s4 + $0x40] sm:$0xf]
    %v387 = vld [vmem:[%s4 + $0x44] sm:$0xf]
    %v388 = vld [vmem:[%s4 + $0x48] sm:$0xf]
    %v389 = vld [vmem:[%s4 + $0x4c] sm:$0xf]
    %v390 = vld [vmem:[%s4 + $0x50] sm:$0xf]
    %v391 = vld [vmem:[%s4 + $0x54] sm:$0xf]
    %v392 = vld [vmem:[%s4 + $0x58] sm:$0xf]
    %v393 = vld [vmem:[%s4 + $0x5c] sm:$0xf]
    %v394 = vld [vmem:[%s4 + $0x60] sm:$0xf]
    %v395 = vld [vmem:[%s4 + $0x64] sm:$0xf]
    %v396 = vld [vmem:[%s4 + $0x68] sm:$0xf]
    %v397 = vld [vmem:[%s4 + $0x6c] sm:$0xf]
    %v398 = vld [vmem:[%s4 + $0x70] sm:$0xf]
    %v399 = vld [vmem:[%s4 + $0x74] sm:$0xf]
    %v400 = vld [vmem:[%s4 + $0x78] sm:$0xf]
    %v401 = vld [vmem:[%s4 + $0x7c] sm:$0xf]
    %v402 = vld [vmem:[%s5] sm:$0x1]
    %v404 = vlaneseq
    %v405 = vshrl.u32 %v404, 7
    %v406 = vsub.s32 0, %v405
    %v407 = vrot.slane %v402, %v406
    %v441 = vunpack.c.l.b16 %v370
    %v442 = vunpack.c.l.b16 %v371
    %v443 = vunpack.c.l.b16 %v372
    %v444 = vunpack.c.l.b16 %v373
    %v445 = vunpack.c.l.b16 %v374
    %v446 = vunpack.c.l.b16 %v375
    %v447 = vunpack.c.l.b16 %v376
    %v448 = vunpack.c.l.b16 %v377
    %v449 = vunpack.c.l.b16 %v378
    %v450 = vunpack.c.l.b16 %v379
    %v451 = vunpack.c.l.b16 %v380
    %v452 = vunpack.c.l.b16 %v381
    %v453 = vunpack.c.l.b16 %v382
    %v454 = vunpack.c.l.b16 %v383
    %v455 = vunpack.c.l.b16 %v384
    %v456 = vunpack.c.l.b16 %v385
    %v457 = vunpack.c.l.b16 %v386
    %v458 = vunpack.c.l.b16 %v387
    %v459 = vunpack.c.l.b16 %v388
    %v460 = vunpack.c.l.b16 %v389
    %v461 = vunpack.c.l.b16 %v390
    %v462 = vunpack.c.l.b16 %v391
    %v463 = vunpack.c.l.b16 %v392
    %v464 = vunpack.c.l.b16 %v393
    %v465 = vunpack.c.l.b16 %v394
    %v466 = vunpack.c.l.b16 %v395
    %v467 = vunpack.c.l.b16 %v396
    %v468 = vunpack.c.l.b16 %v397
    %v469 = vunpack.c.l.b16 %v398
    %v470 = vunpack.c.l.b16 %v399
    %v471 = vunpack.c.l.b16 %v400
    %v472 = vunpack.c.l.b16 %v401
    %v473 = vpack.c.b16 %v442, %v441
    %v474 = vpack.c.b16 %v444, %v443
    %v475 = vpack.c.b16 %v446, %v445
    %v476 = vpack.c.b16 %v448, %v447
    %v477 = vpack.c.b16 %v450, %v449
    %v478 = vpack.c.b16 %v452, %v451
    %v479 = vpack.c.b16 %v454, %v453
    %v480 = vpack.c.b16 %v456, %v455
    %v481 = vpack.c.b16 %v458, %v457
    %v482 = vpack.c.b16 %v460, %v459
    %v483 = vpack.c.b16 %v462, %v461
    %v484 = vpack.c.b16 %v464, %v463
    %v485 = vpack.c.b16 %v466, %v465
    %v486 = vpack.c.b16 %v468, %v467
    %v487 = vpack.c.b16 %v470, %v469
    %v488 = vpack.c.b16 %v472, %v471
    %505 = vmatprep.subr.bf16.mxu0 0
    %506 = vmatpush1.bf16.msra.mxu0 %v473
    %507 = vmatprep.subr.bf16.mxu0 0
    %508 = vmatpush1.bf16.msra.mxu0 %v474
    %509 = vmatprep.subr.bf16.mxu0 0
    %510 = vmatpush1.bf16.msra.mxu0 %v475
    %511 = vmatprep.subr.bf16.mxu0 0
    %512 = vmatpush1.bf16.msra.mxu0 %v476
    %513 = vmatprep.subr.bf16.mxu0 0
    %514 = vmatpush1.bf16.msra.mxu0 %v477
    %515 = vmatprep.subr.bf16.mxu0 0
    %516 = vmatpush1.bf16.msra.mxu0 %v478
    %517 = vmatprep.subr.bf16.mxu0 0
    %518 = vmatpush1.bf16.msra.mxu0 %v479
    %519 = vmatprep.subr.bf16.mxu0 0
    %520 = vmatpush1.bf16.msra.mxu0 %v480
    %521 = vmatprep.subr.bf16.mxu0 0
    %522 = vmatpush1.bf16.msra.mxu0 %v481
    %523 = vmatprep.subr.bf16.mxu0 0
    %524 = vmatpush1.bf16.msra.mxu0 %v482
    %525 = vmatprep.subr.bf16.mxu0 0
    %526 = vmatpush1.bf16.msra.mxu0 %v483
    %527 = vmatprep.subr.bf16.mxu0 0
    %528 = vmatpush1.bf16.msra.mxu0 %v484
    %529 = vmatprep.subr.bf16.mxu0 0
    %530 = vmatpush1.bf16.msra.mxu0 %v485
    %531 = vmatprep.subr.bf16.mxu0 0
    %532 = vmatpush1.bf16.msra.mxu0 %v486
    %533 = vmatprep.subr.bf16.mxu0 0
    %534 = vmatpush1.bf16.msra.mxu0 %v487
    %535 = vmatprep.subr.bf16.mxu0 0
    %536 = vmatpush1.bf16.msra.mxu0 %v488
    %537 = vmatprep.mubr.bf16.mxu0 %v363
    %538 = vmatmul.mubr.bf16.gmra.mrb[0].mxu0 %v362
    %v539 = vpop.f32.mrb[0].mxu0
    %v540 = vadd.f32 %v407, %v539
    %v541 = vpop.f32.mrb[0].mxu0
    %v542 = vpop.f32.mrb[0].mxu0
    %v543 = vadd.f32 %v407, %v542
    %v544 = vpop.f32.mrb[0].mxu0
    %545 = vmatprep.mubr.bf16.mxu0 %v365
    %546 = vmatmul.mubr.bf16.gmra.mrb[0].mxu0 %v364
    %v547 = vpop.f32.mrb[0].mxu0
    %v548 = vadd.f32 %v407, %v547
    %v549 = vpop.f32.mrb[0].mxu0
    %v550 = vpop.f32.mrb[0].mxu0
    %v551 = vadd.f32 %v407, %v550
    %v552 = vpop.f32.mrb[0].mxu0
    %553 = vmatprep.mubr.bf16.mxu0 %v367
    %554 = vmatmul.mubr.bf16.gmra.mrb[0].mxu0 %v366
    %v555 = vpop.f32.mrb[0].mxu0
    %v556 = vadd.f32 %v407, %v555
    %v557 = vpop.f32.mrb[0].mxu0
    %v558 = vpop.f32.mrb[0].mxu0
    %v559 = vadd.f32 %v407, %v558
    %v560 = vpop.f32.mrb[0].mxu0
    %561 = vmatprep.mubr.bf16.mxu0 %v369
    %562 = vmatmul.mubr.bf16.gmra.mrb[0].mxu0 %v368
    %v563 = vpop.f32.mrb[0].mxu0
    %v564 = vadd.f32 %v407, %v563
    %v565 = vpop.f32.mrb[0].mxu0
    %v566 = vpop.f32.mrb[0].mxu0
    %v567 = vadd.f32 %v407, %v566
    %v568 = vpop.f32.mrb[0].mxu0
    %569 = vdwg.mxu0
    %v570 = vld [vmem:[%s1] sm:$0xff]
    %v571 = vld [vmem:[%s1 + $0x8] sm:$0xff]
    %v572 = vld [vmem:[%s1 + $0x10] sm:$0xff]
    %v573 = vld [vmem:[%s1 + $0x18] sm:$0xff]
    %v574 = vld [vmem:[%s1 + $0x20] sm:$0xff]
    %v575 = vld [vmem:[%s1 + $0x28] sm:$0xff]
    %v576 = vld [vmem:[%s1 + $0x30] sm:$0xff]
    %v577 = vld [vmem:[%s1 + $0x38] sm:$0xff]
    %579 = vset.pattern.permute.xlu0 0
    %580 = vperm.xlu0 %579, %v570
    %v581 = vpop.permute.xlu0 %580
    %584 = vset.pattern.permute.xlu0 0
    %585 = vperm.xlu0 %584, %v571
    %v586 = vpop.permute.xlu0 %585
    %589 = vset.pattern.permute.xlu0 0
    %590 = vperm.xlu0 %589, %v572
    %v591 = vpop.permute.xlu0 %590
    %594 = vset.pattern.permute.xlu0 0
    %595 = vperm.xlu0 %594, %v573
    %v596 = vpop.permute.xlu0 %595
    %599 = vset.pattern.permute.xlu0 0
    %600 = vperm.xlu0 %599, %v574
    %v601 = vpop.permute.xlu0 %600
    %604 = vset.pattern.permute.xlu0 0
    %605 = vperm.xlu0 %604, %v575
    %v606 = vpop.permute.xlu0 %605
    %609 = vset.pattern.permute.xlu0 0
    %610 = vperm.xlu0 %609, %v576
    %v611 = vpop.permute.xlu0 %610
    %614 = vset.pattern.permute.xlu0 0
    %615 = vperm.xlu0 %614, %v577
    %v616 = vpop.permute.xlu0 %615
    %v618 = vmul.f32 %v581, %v540
    %v619 = vmul.f32 %v586, %v543
    %v620 = vmul.f32 %v591, %v548
    %v621 = vmul.f32 %v596, %v551
    %v622 = vmul.f32 %v601, %v556
    %v623 = vmul.f32 %v606, %v559
    %v624 = vmul.f32 %v611, %v564
    %v625 = vmul.f32 %v616, %v567
    %626 = vset.pattern.permute.xlu0 1
    %627 = vperm.xlu0 %626, %v570
    %v628 = vpop.permute.xlu0 %627
    %630 = vset.pattern.permute.xlu0 1
    %631 = vperm.xlu0 %630, %v571
    %v632 = vpop.permute.xlu0 %631
    %634 = vset.pattern.permute.xlu0 1
    %635 = vperm.xlu0 %634, %v572
    %v636 = vpop.permute.xlu0 %635
    %638 = vset.pattern.permute.xlu0 1
    %639 = vperm.xlu0 %638, %v573
    %v640 = vpop.permute.xlu0 %639
    %642 = vset.pattern.permute.xlu0 1
    %643 = vperm.xlu0 %642, %v574
    %v644 = vpop.permute.xlu0 %643
    %646 = vset.pattern.permute.xlu0 1
    %647 = vperm.xlu0 %646, %v575
    %v648 = vpop.permute.xlu0 %647
    %650 = vset.pattern.permute.xlu0 1
    %651 = vperm.xlu0 %650, %v576
    %v652 = vpop.permute.xlu0 %651
    %654 = vset.pattern.permute.xlu0 1
    %655 = vperm.xlu0 %654, %v577
    %v656 = vpop.permute.xlu0 %655
    %v658 = vmul.f32 %v628, %v25
    %v659 = vmul.f32 %v632, %v26
    %v660 = vmul.f32 %v636, %v27
    %v661 = vmul.f32 %v640, %v28
    %v662 = vmul.f32 %v644, %v29
    %v663 = vmul.f32 %v648, %v30
    %v664 = vmul.f32 %v652, %v31
    %v665 = vmul.f32 %v656, %v32
    %v666 = vadd.f32 %v618, %v658
    %v667 = vadd.f32 %v619, %v659
    %v668 = vadd.f32 %v620, %v660
    %v669 = vadd.f32 %v621, %v661
    %v670 = vadd.f32 %v622, %v662
    %v671 = vadd.f32 %v623, %v663
    %v672 = vadd.f32 %v624, %v664
    %v673 = vadd.f32 %v625, %v665
    %674 = vst [vmem:[#allocation2] sm:$0xff] %v666
    %675 = vst [vmem:[#allocation2 + $0x8] sm:$0xff] %v667
    %676 = vst [vmem:[#allocation2 + $0x10] sm:$0xff] %v668
    %677 = vst [vmem:[#allocation2 + $0x18] sm:$0xff] %v669
    %678 = vst [vmem:[#allocation2 + $0x20] sm:$0xff] %v670
    %679 = vst [vmem:[#allocation2 + $0x28] sm:$0xff] %v671
    %680 = vst [vmem:[#allocation2 + $0x30] sm:$0xff] %v672
    %681 = vst [vmem:[#allocation2 + $0x38] sm:$0xff] %v673
    // Predicated region
    $region26: #{intra_node_moe_forward.3} parent=1 // pred_check
      _
    $region27: #{intra_node_moe_forward.3} parent=1 // pred_check_branch
      %683 = sbr.rel (0) target = $region29
    $region28: #{intra_node_moe_forward.3} parent=1 // pred_region
      %s685 = ssub.s32 1024, 1024
      %686 = vsyncadd [#allocation3], %s685
      %s687 = sshll.u32 [#allocation2], 4
      %s688 = int_to_ptr.vmem [resolvable:$true] %s687
      %693 = dma.vmem_to_hbm [thread:$0]  %s688, 1024, %s6, [#allocation3], 128, 128, 8
    $region29: #{intra_node_moe_forward.3} parent=1 // pred_fallthru
      _
    // Predicated region
    $region30: #{intra_node_moe_forward.3} parent=1 // pred_check
      _
    $region31: #{intra_node_moe_forward.3} parent=1 // pred_check_branch
      %695 = sbr.rel (0) target = $region33
    $region32: #{intra_node_moe_forward.3} parent=1 // pred_region
      %696 = dma.done [#allocation3], 1024
    $region33: #{intra_node_moe_forward.3} parent=1 // pred_fallthru
      _
    %697 = vsyncpa [#allocation3], 1

</llo_original>
